<compile_context>
chip_gen: v7x
topology: tpu7x:2x2x1
jax: 0.10.0
libtpu: 0.0.40
codegen_flags: <defaults>
</compile_context>

<pallas_src>
import functools

import numpy as np

import jax
import jax.numpy as jnp
from jax import lax
from jax.experimental import pallas as pl
from jax.experimental.pallas import tpu as pltpu


def _csam_kernel(x_ref, w1t_ref, w2t_ref, masks_ref, saw_ref, sab_ref, o_ref,
                 *, Bt, C, Cr, H, W, K, HWp, padded):
    """One grid step: Bt images, each lane-dense as (C, HWp) in VMEM."""
    P = K // 2
    HW = H * W

    x = x_ref[...]                                   # (Bt, C, HWp), native dtype
    w1t = w1t_ref[...]                               # (C, Cr)  f32  (se[0].weight^T)
    w2t = w2t_ref[...]                               # (Cr, C)  f32  (se[2].weight^T)
    masks = masks_ref[...]                           # (2K, HWp) f32 validity masks

    # ---- Channel attention: global max / avg pool over the spatial lanes ----
    if padded:
        lane = lax.broadcasted_iota(jnp.int32, (1, 1, HWp), 2)
        xmax_src = jnp.where(lane < HW, x, jnp.asarray(-jnp.inf, x.dtype))
    else:
        xmax_src = x
    maxp = jnp.max(xmax_src, axis=2).astype(jnp.float32)          # (Bt, C)
    avgp = jnp.sum(x, axis=2, dtype=jnp.float32) * (1.0 / HW)     # (Bt, C)

    # ---- Shared SE MLP: both pooled branches batched, evaluated on the MXU ----
    p = jnp.concatenate([maxp, avgp], axis=0)                                   # (2Bt, C)
    h = jnp.maximum(jnp.dot(p, w1t, preferred_element_type=jnp.float32), 0.0)   # (2Bt, Cr)
    se = jnp.dot(h, w2t, preferred_element_type=jnp.float32)                    # (2Bt, C)
    ca = jax.nn.sigmoid(se[:Bt] + se[Bt:])                                      # (Bt, C) f32

    # ---- Spatial-attention inputs: channel max / mean of (x * ca).
    # out1 = x*ca dies here (not live across the conv); output is x*(1 + ca*sa).
    if x.dtype == jnp.bfloat16:
        xc = x * ca.astype(jnp.bfloat16)[:, :, None]              # bf16 VPU path (v6e/v7x)
    else:
        xc = x.astype(jnp.float32) * ca[:, :, None]
    max_c = jnp.max(xc, axis=1).astype(jnp.float32)               # (Bt, HWp)
    mean_c = jnp.sum(xc, axis=1, dtype=jnp.float32) * (1.0 / C)   # (Bt, HWp)

    # ---- K x K "SAME" zero-pad conv (2 -> 1), factorized via linearity of roll:
    # K column rolls per map (column masks folded in) + K row rolls  => ~3K rolls.
    col_max, col_mean = [], []
    for dx in range(K):
        colm = masks[dx:dx + 1, :]                                # (1, HWp)
        sh = (-(dx - P)) % HWp
        rm = max_c if sh == 0 else pltpu.roll(max_c, shift=sh, axis=1)
        ra = mean_c if sh == 0 else pltpu.roll(mean_c, shift=sh, axis=1)
        col_max.append(rm * colm)
        col_mean.append(ra * colm)

    acc = jnp.zeros((Bt, HWp), jnp.float32)
    for dy in range(K):
        part = jnp.zeros((Bt, HWp), jnp.float32)
        for dx in range(K):
            wm = saw_ref[dy * K + dx]                 # weight on the channel-max map (SMEM)
            wa = saw_ref[K * K + dy * K + dx]         # weight on the channel-mean map (SMEM)
            part = part + wm * col_max[dx] + wa * col_mean[dx]
        sh = (-(dy - P) * W) % HWp
        rr = part if sh == 0 else pltpu.roll(part, shift=sh, axis=1)
        acc = acc + rr * masks[K + dy:K + dy + 1, :]

    sa = jax.nn.sigmoid(acc + sab_ref[0])                         # (Bt, HWp) f32

    # ---- Residual output: x * (1 + ca * sa) ----
    if x.dtype == jnp.bfloat16:
        gate = (1.0 + ca[:, :, None] * sa[:, None, :]).astype(jnp.bfloat16)
        o_ref[...] = x * gate
    else:
        o_ref[...] = (x.astype(jnp.float32)
                      * (1.0 + ca[:, :, None] * sa[:, None, :])).astype(o_ref.dtype)


def _tpu_vmem_and_cores():
    """Best-effort hardware query; falls back to conservative (v7x-safe) defaults."""
    vmem_cap = 64 << 20        # conservative default: v7x per-TensorCore VMEM
    n_tc = 1
    try:
        info = pltpu.get_tpu_info()
        cap = int(getattr(info, "vmem_capacity_bytes", 0) or 0)
        if cap > 0:
            vmem_cap = cap
        for attr in ("num_tensorcores", "tensorcores_per_chip", "num_cores", "core_count"):
            v = getattr(info, attr, None)
            if isinstance(v, (int, np.integer)) and int(v) > 1:
                n_tc = int(v)
                break
    except Exception:
        pass
    return vmem_cap, n_tc


def csam_forward(x, w1, w2, sa_w, sa_b, *, kernel_size):
    B, C, H, W = x.shape
    Cr = w1.shape[0]
    K = kernel_size
    P = K // 2
    HW = H * W
    HWp = ((HW + 127) // 128) * 128          # lane-dense: pad flat spatial dim to 128
    padded = HWp != HW

    x_flat = x.reshape(B, C, HW)             # free reshape to lane-dense layout
    if padded:
        x_flat = jnp.pad(x_flat, ((0, 0), (0, 0), (0, HWp - HW)))

    w1t = jnp.asarray(w1, jnp.float32).T                  # (C, Cr)  se[0] weight^T (MXU)
    w2t = jnp.asarray(w2, jnp.float32).T                  # (Cr, C)  se[2] weight^T (MXU)
    saw_flat = jnp.asarray(sa_w, jnp.float32).reshape(-1)  # (2*K*K,) scalars -> SMEM
    sab_flat = jnp.asarray(sa_b, jnp.float32).reshape(-1)  # (1,)     scalar  -> SMEM

    # Validity masks for the SAME zero-pad conv, hoisted out of the kernel.
    # Rows [0, K): column masks (per dx); rows [K, 2K): row masks (per dy).
    pos = np.arange(HWp)
    row = pos // W
    col = pos % W
    real = pos < HW
    masks_np = np.zeros((2 * K, HWp), np.float32)
    for dx in range(K):
        masks_np[dx] = real & (col + dx - P >= 0) & (col + dx - P < W)
    for dy in range(K):
        masks_np[K + dy] = real & (row + dy - P >= 0) & (row + dy - P < H)
    masks = jnp.asarray(masks_np)

    vmem_cap, n_tc = _tpu_vmem_and_cores()
    # Per-image working set: double-buffered in + out blocks (native dtype) plus
    # ~2 f32-sized intermediates (xc / output gate) live at the peak.
    per_img = C * HWp * (4 * x.dtype.itemsize + 2 * 4)
    budget = int(vmem_cap * 0.55)
    bt = max(1, min(B, budget // max(per_img, 1)))
    if n_tc > 1 and B >= n_tc:
        bt = min(bt, max(1, B // n_tc))      # keep >= n_tc grid steps only on multi-TC parts
    while B % bt:
        bt -= 1
    # TODO(synk): if a single image's working set exceeds the VMEM budget (e.g. C=512,
    # H=W=128 f32 on v7x's 64 MiB), add an H-tiled two-pass fallback with a K//2 halo.

    kernel = functools.partial(_csam_kernel, Bt=bt, C=C, Cr=Cr, H=H, W=W, K=K,
                               HWp=HWp, padded=padded)

    working = bt * per_img + (2 * K * HWp + 2 * C * Cr) * 4
    vmem_limit = int(min(max(working + (8 << 20), 32 << 20), int(vmem_cap * 0.75)))

    cost = pl.CostEstimate(
        flops=int(B * (8 * C * HW + 4 * K * K * HW + 8 * C * Cr)),
        transcendentals=int(B * (C + HW)),
        bytes_accessed=int(2 * B * C * HW * x.dtype.itemsize),
    )

    out = pl.pallas_call(
        kernel,
        out_shape=jax.ShapeDtypeStruct((B, C, HWp), x.dtype),
        grid=(B // bt,),
        in_specs=[
            pl.BlockSpec((bt, C, HWp), lambda b: (b, 0, 0)),
            pl.BlockSpec((C, Cr), lambda b: (0, 0)),
            pl.BlockSpec((Cr, C), lambda b: (0, 0)),
            pl.BlockSpec((2 * K, HWp), lambda b: (0, 0)),
            pl.BlockSpec(memory_space=pltpu.MemorySpace.SMEM),
            pl.BlockSpec(memory_space=pltpu.MemorySpace.SMEM),
        ],
        out_specs=pl.BlockSpec((bt, C, HWp), lambda b: (b, 0, 0)),
        compiler_params=pltpu.CompilerParams(
            dimension_semantics=("parallel",),
            vmem_limit_bytes=vmem_limit,
        ),
        cost_estimate=cost,
    )(x_flat, w1t, w2t, masks, saw_flat, sab_flat)

    if padded:
        out = out[:, :, :HW]
    return out.reshape(B, C, H, W)


def ref_forward(x, w1, w2, sa_w, sa_b):
    """Pure-JAX reference matching the PyTorch CSAMBlock forward."""
    maxp = jnp.max(x, axis=(2, 3))
    avgp = jnp.mean(x, axis=(2, 3))

    def se(p):
        return jnp.maximum(p @ w1.T, 0.0) @ w2.T

    ca = jax.nn.sigmoid(se(maxp) + se(avgp))[:, :, None, None]
    out = x * ca
    maxc = jnp.max(out, axis=1, keepdims=True)
    meanc = jnp.mean(out, axis=1, keepdims=True)
    stacked = jnp.concatenate([maxc, meanc], axis=1)
    k = sa_w.shape[-1]
    conv = lax.conv_general_dilated(
        stacked, sa_w.reshape(1, 2, k, k), window_strides=(1, 1), padding="SAME",
        dimension_numbers=("NCHW", "OIHW", "NCHW")) + sa_b.reshape(1, 1, 1, 1)
    sa = jax.nn.sigmoid(conv)
    return out * sa + x


if __name__ == "__main__":
    # Small config consistent with CSAMBlock(channel, reduction, kernel_size):
    # channel=16, reduction=4, kernel_size=7, input (2, 16, 16, 16) NCHW.
    B, C, H, W = 2, 16, 16, 16
    reduction = 4
    K = 7
    Cr = C // reduction

    key = jax.random.PRNGKey(0)
    kx, k1, k2, k3, k4 = jax.random.split(key, 5)
    x = jax.random.normal(kx, (B, C, H, W), jnp.float32)
    w1 = jax.random.normal(k1, (Cr, C), jnp.float32) * 0.1       # se[0]: Conv2d(C, C//r, 1, bias=False)
    w2 = jax.random.normal(k2, (C, Cr), jnp.float32) * 0.1       # se[2]: Conv2d(C//r, C, 1, bias=False)
    sa_w = jax.random.normal(k3, (2, K, K), jnp.float32) * 0.05  # SpatialAttention Conv2d(2, 1, K) weight
    sa_b = jax.random.normal(k4, (1,), jnp.float32) * 0.01       # its bias

    out = csam_forward(x, w1, w2, sa_w, sa_b, kernel_size=K)
    out = jax.block_until_ready(out)

    ref = ref_forward(x, w1, w2, sa_w, sa_b)
    assert out.shape == (B, C, H, W)
    err = float(jnp.max(jnp.abs(out - ref)))
    assert jnp.allclose(out, ref, atol=1e-4, rtol=1e-4), f"max abs err {err}"
    print("KERNEL_OK")
</pallas_src>

<mosaic_0001>
module attributes {stable_mosaic.version = 11 : i64} {
  func.func @_csam_kernel(%arg0: i32, %arg1: memref<2x16x256xf32, #tpu.memory_space<vmem>>, %arg2: memref<16x4xf32, #tpu.memory_space<vmem>>, %arg3: memref<4x16xf32, #tpu.memory_space<vmem>>, %arg4: memref<14x256xf32, #tpu.memory_space<vmem>>, %arg5: memref<98xf32, #tpu.memory_space<smem>>, %arg6: memref<1xf32, #tpu.memory_space<smem>>, %arg7: memref<2x16x256xf32, #tpu.memory_space<vmem>>) attributes {dimension_semantics = [#tpu.dimension_semantics<parallel>], iteration_bounds = array<i64: 1>, scalar_prefetch = 0 : i64, scratch_operands = 0 : i64, tpu.core_type = #tpu.core_type<tc>, window_params = [{transform_indices = @transform_0, window_bounds = array<i64: 2, 16, 256>}, {pipeline_mode = #tpu.pipeline_mode<synchronous>, transform_indices = @transform_1, window_bounds = array<i64: 16, 4>}, {pipeline_mode = #tpu.pipeline_mode<synchronous>, transform_indices = @transform_2, window_bounds = array<i64: 4, 16>}, {pipeline_mode = #tpu.pipeline_mode<synchronous>, transform_indices = @transform_3, window_bounds = array<i64: 14, 256>}, {transform_indices = @transform_4, window_bounds = array<i64: 98>}, {transform_indices = @transform_5, window_bounds = array<i64: 1>}, {transform_indices = @transform_6, window_bounds = array<i64: 2, 16, 256>}]} {
    %c0 = arith.constant 0 : index
    %c0_0 = arith.constant 0 : index
    %c0_1 = arith.constant 0 : index
    %0 = vector.load %arg1[%c0, %c0_0, %c0_1] : memref<2x16x256xf32, #tpu.memory_space<vmem>>, vector<2x16x256xf32>
    %c0_2 = arith.constant 0 : index
    %c0_3 = arith.constant 0 : index
    %1 = vector.load %arg2[%c0_2, %c0_3] : memref<16x4xf32, #tpu.memory_space<vmem>>, vector<16x4xf32>
    %c0_4 = arith.constant 0 : index
    %c0_5 = arith.constant 0 : index
    %2 = vector.load %arg3[%c0_4, %c0_5] : memref<4x16xf32, #tpu.memory_space<vmem>>, vector<4x16xf32>
    %c0_6 = arith.constant 0 : index
    %c0_7 = arith.constant 0 : index
    %3 = vector.load %arg4[%c0_6, %c0_7] : memref<14x256xf32, #tpu.memory_space<vmem>>, vector<14x256xf32>
    %cst = arith.constant dense<0xFF800000> : vector<2x16xf32>
    %4 = vector.multi_reduction <maximumf>, %0, %cst [2] : vector<2x16x256xf32> to vector<2x16xf32>
    %cst_8 = arith.constant dense<0.000000e+00> : vector<2x16xf32>
    %5 = vector.multi_reduction <add>, %0, %cst_8 [2] : vector<2x16x256xf32> to vector<2x16xf32>
    %cst_9 = arith.constant 3.906250e-03 : f32
    %6 = vector.broadcast %cst_9 : f32 to vector<2x16xf32>
    %7 = arith.mulf %5, %6 : vector<2x16xf32>
    %8 = tpu.concatenate %4, %7 in 0 : vector<2x16xf32>, vector<2x16xf32> -> vector<4x16xf32>
    %cst_10 = arith.constant dense<0.000000e+00> : vector<4x4xf32>
    %9 = tpu.matmul %8, %1, %cst_10 {dimension_numbers = #tpu.dot_dimension_numbers<[1], [0], [0], [1], [0, 0, 1, 1], [], []>} : vector<4x16xf32>, vector<16x4xf32>, vector<4x4xf32> -> vector<4x4xf32>
    %cst_11 = arith.constant 0.000000e+00 : f32
    %10 = vector.broadcast %cst_11 : f32 to vector<4x4xf32>
    %11 = arith.maximumf %9, %10 : vector<4x4xf32>
    %cst_12 = arith.constant dense<0.000000e+00> : vector<4x16xf32>
    %12 = tpu.matmul %11, %2, %cst_12 {dimension_numbers = #tpu.dot_dimension_numbers<[1], [0], [0], [1], [0, 0, 1, 1], [], []>} : vector<4x4xf32>, vector<4x16xf32>, vector<4x16xf32> -> vector<4x16xf32>
    %13 = vector.extract_strided_slice %12 {offsets = [0, 0], sizes = [2, 16], strides = [1, 1]} : vector<4x16xf32> to vector<2x16xf32>
    %14 = vector.extract_strided_slice %12 {offsets = [2, 0], sizes = [2, 16], strides = [1, 1]} : vector<4x16xf32> to vector<2x16xf32>
    %15 = arith.addf %13, %14 : vector<2x16xf32>
    %16 = arith.negf %15 : vector<2x16xf32>
    %17 = math.exp %16 : vector<2x16xf32>
    %cst_13 = arith.constant 1.000000e+00 : f32
    %18 = vector.broadcast %cst_13 : f32 to vector<2x16xf32>
    %19 = arith.addf %18, %17 : vector<2x16xf32>
    %20 = arith.divf %18, %19 : vector<2x16xf32>
    %21 = vector.shape_cast %20 : vector<2x16xf32> to vector<2x16x1xf32>
    %22 = vector.broadcast %21 : vector<2x16x1xf32> to vector<2x16x256xf32>
    %23 = arith.mulf %0, %22 : vector<2x16x256xf32>
    %cst_14 = arith.constant dense<0xFF800000> : vector<2x256xf32>
    %24 = vector.multi_reduction <maximumf>, %23, %cst_14 [1] : vector<2x16x256xf32> to vector<2x256xf32>
    %cst_15 = arith.constant dense<0.000000e+00> : vector<2x256xf32>
    %25 = vector.multi_reduction <add>, %23, %cst_15 [1] : vector<2x16x256xf32> to vector<2x256xf32>
    %cst_16 = arith.constant 6.250000e-02 : f32
    %26 = vector.broadcast %cst_16 : f32 to vector<2x256xf32>
    %27 = arith.mulf %25, %26 : vector<2x256xf32>
    %28 = vector.extract_strided_slice %3 {offsets = [0, 0], sizes = [1, 256], strides = [1, 1]} : vector<14x256xf32> to vector<1x256xf32>
    %c3_i32 = arith.constant 3 : i32
    %29 = tpu.dynamic_rotate %24 by %c3_i32 dim 1 : vector<2x256xf32>, i32 -> vector<2x256xf32>
    %c3_i32_17 = arith.constant 3 : i32
    %30 = tpu.dynamic_rotate %27 by %c3_i32_17 dim 1 : vector<2x256xf32>, i32 -> vector<2x256xf32>
    %31 = vector.broadcast %28 : vector<1x256xf32> to vector<2x256xf32>
    %32 = arith.mulf %29, %31 : vector<2x256xf32>
    %33 = vector.broadcast %28 : vector<1x256xf32> to vector<2x256xf32>
    %34 = arith.mulf %30, %33 : vector<2x256xf32>
    %35 = vector.extract_strided_slice %3 {offsets = [1, 0], sizes = [1, 256], strides = [1, 1]} : vector<14x256xf32> to vector<1x256xf32>
    %c2_i32 = arith.constant 2 : i32
    %36 = tpu.dynamic_rotate %24 by %c2_i32 dim 1 : vector<2x256xf32>, i32 -> vector<2x256xf32>
    %c2_i32_18 = arith.constant 2 : i32
    %37 = tpu.dynamic_rotate %27 by %c2_i32_18 dim 1 : vector<2x256xf32>, i32 -> vector<2x256xf32>
    %38 = vector.broadcast %35 : vector<1x256xf32> to vector<2x256xf32>
    %39 = arith.mulf %36, %38 : vector<2x256xf32>
    %40 = vector.broadcast %35 : vector<1x256xf32> to vector<2x256xf32>
    %41 = arith.mulf %37, %40 : vector<2x256xf32>
    %42 = vector.extract_strided_slice %3 {offsets = [2, 0], sizes = [1, 256], strides = [1, 1]} : vector<14x256xf32> to vector<1x256xf32>
    %c1_i32 = arith.constant 1 : i32
    %43 = tpu.dynamic_rotate %24 by %c1_i32 dim 1 : vector<2x256xf32>, i32 -> vector<2x256xf32>
    %c1_i32_19 = arith.constant 1 : i32
    %44 = tpu.dynamic_rotate %27 by %c1_i32_19 dim 1 : vector<2x256xf32>, i32 -> vector<2x256xf32>
    %45 = vector.broadcast %42 : vector<1x256xf32> to vector<2x256xf32>
    %46 = arith.mulf %43, %45 : vector<2x256xf32>
    %47 = vector.broadcast %42 : vector<1x256xf32> to vector<2x256xf32>
    %48 = arith.mulf %44, %47 : vector<2x256xf32>
    %49 = vector.extract_strided_slice %3 {offsets = [3, 0], sizes = [1, 256], strides = [1, 1]} : vector<14x256xf32> to vector<1x256xf32>
    %50 = vector.broadcast %49 : vector<1x256xf32> to vector<2x256xf32>
    %51 = arith.mulf %24, %50 : vector<2x256xf32>
    %52 = vector.broadcast %49 : vector<1x256xf32> to vector<2x256xf32>
    %53 = arith.mulf %27, %52 : vector<2x256xf32>
    %54 = vector.extract_strided_slice %3 {offsets = [4, 0], sizes = [1, 256], strides = [1, 1]} : vector<14x256xf32> to vector<1x256xf32>
    %c255_i32 = arith.constant 255 : i32
    %55 = tpu.dynamic_rotate %24 by %c255_i32 dim 1 : vector<2x256xf32>, i32 -> vector<2x256xf32>
    %c255_i32_20 = arith.constant 255 : i32
    %56 = tpu.dynamic_rotate %27 by %c255_i32_20 dim 1 : vector<2x256xf32>, i32 -> vector<2x256xf32>
    %57 = vector.broadcast %54 : vector<1x256xf32> to vector<2x256xf32>
    %58 = arith.mulf %55, %57 : vector<2x256xf32>
    %59 = vector.broadcast %54 : vector<1x256xf32> to vector<2x256xf32>
    %60 = arith.mulf %56, %59 : vector<2x256xf32>
    %61 = vector.extract_strided_slice %3 {offsets = [5, 0], sizes = [1, 256], strides = [1, 1]} : vector<14x256xf32> to vector<1x256xf32>
    %c254_i32 = arith.constant 254 : i32
    %62 = tpu.dynamic_rotate %24 by %c254_i32 dim 1 : vector<2x256xf32>, i32 -> vector<2x256xf32>
    %c254_i32_21 = arith.constant 254 : i32
    %63 = tpu.dynamic_rotate %27 by %c254_i32_21 dim 1 : vector<2x256xf32>, i32 -> vector<2x256xf32>
    %64 = vector.broadcast %61 : vector<1x256xf32> to vector<2x256xf32>
    %65 = arith.mulf %62, %64 : vector<2x256xf32>
    %66 = vector.broadcast %61 : vector<1x256xf32> to vector<2x256xf32>
    %67 = arith.mulf %63, %66 : vector<2x256xf32>
    %68 = vector.extract_strided_slice %3 {offsets = [6, 0], sizes = [1, 256], strides = [1, 1]} : vector<14x256xf32> to vector<1x256xf32>
    %c253_i32 = arith.constant 253 : i32
    %69 = tpu.dynamic_rotate %24 by %c253_i32 dim 1 : vector<2x256xf32>, i32 -> vector<2x256xf32>
    %c253_i32_22 = arith.constant 253 : i32
    %70 = tpu.dynamic_rotate %27 by %c253_i32_22 dim 1 : vector<2x256xf32>, i32 -> vector<2x256xf32>
    %71 = vector.broadcast %68 : vector<1x256xf32> to vector<2x256xf32>
    %72 = arith.mulf %69, %71 : vector<2x256xf32>
    %73 = vector.broadcast %68 : vector<1x256xf32> to vector<2x256xf32>
    %74 = arith.mulf %70, %73 : vector<2x256xf32>
    %cst_23 = arith.constant 0.000000e+00 : f32
    %75 = vector.broadcast %cst_23 : f32 to vector<2x256xf32>
    %cst_24 = arith.constant 0.000000e+00 : f32
    %76 = vector.broadcast %cst_24 : f32 to vector<2x256xf32>
    %c0_25 = arith.constant 0 : index
    %77 = memref.load %arg5[%c0_25] : memref<98xf32, #tpu.memory_space<smem>>
    %c49 = arith.constant 49 : index
    %78 = memref.load %arg5[%c49] : memref<98xf32, #tpu.memory_space<smem>>
    %79 = vector.broadcast %77 : f32 to vector<2x256xf32>
    %80 = arith.mulf %79, %32 : vector<2x256xf32>
    %81 = arith.addf %76, %80 : vector<2x256xf32>
    %82 = vector.broadcast %78 : f32 to vector<2x256xf32>
    %83 = arith.mulf %82, %34 : vector<2x256xf32>
    %84 = arith.addf %81, %83 : vector<2x256xf32>
    %c1 = arith.constant 1 : index
    %85 = memref.load %arg5[%c1] : memref<98xf32, #tpu.memory_space<smem>>
    %c50 = arith.constant 50 : index
    %86 = memref.load %arg5[%c50] : memref<98xf32, #tpu.memory_space<smem>>
    %87 = vector.broadcast %85 : f32 to vector<2x256xf32>
    %88 = arith.mulf %87, %39 : vector<2x256xf32>
    %89 = arith.addf %84, %88 : vector<2x256xf32>
    %90 = vector.broadcast %86 : f32 to vector<2x256xf32>
    %91 = arith.mulf %90, %41 : vector<2x256xf32>
    %92 = arith.addf %89, %91 : vector<2x256xf32>
    %c2 = arith.constant 2 : index
    %93 = memref.load %arg5[%c2] : memref<98xf32, #tpu.memory_space<smem>>
    %c51 = arith.constant 51 : index
    %94 = memref.load %arg5[%c51] : memref<98xf32, #tpu.memory_space<smem>>
    %95 = vector.broadcast %93 : f32 to vector<2x256xf32>
    %96 = arith.mulf %95, %46 : vector<2x256xf32>
    %97 = arith.addf %92, %96 : vector<2x256xf32>
    %98 = vector.broadcast %94 : f32 to vector<2x256xf32>
    %99 = arith.mulf %98, %48 : vector<2x256xf32>
    %100 = arith.addf %97, %99 : vector<2x256xf32>
    %c3 = arith.constant 3 : index
    %101 = memref.load %arg5[%c3] : memref<98xf32, #tpu.memory_space<smem>>
    %c52 = arith.constant 52 : index
    %102 = memref.load %arg5[%c52] : memref<98xf32, #tpu.memory_space<smem>>
    %103 = vector.broadcast %101 : f32 to vector<2x256xf32>
    %104 = arith.mulf %103, %51 : vector<2x256xf32>
    %105 = arith.addf %100, %104 : vector<2x256xf32>
    %106 = vector.broadcast %102 : f32 to vector<2x256xf32>
    %107 = arith.mulf %106, %53 : vector<2x256xf32>
    %108 = arith.addf %105, %107 : vector<2x256xf32>
    %c4 = arith.constant 4 : index
    %109 = memref.load %arg5[%c4] : memref<98xf32, #tpu.memory_space<smem>>
    %c53 = arith.constant 53 : index
    %110 = memref.load %arg5[%c53] : memref<98xf32, #tpu.memory_space<smem>>
    %111 = vector.broadcast %109 : f32 to vector<2x256xf32>
    %112 = arith.mulf %111, %58 : vector<2x256xf32>
    %113 = arith.addf %108, %112 : vector<2x256xf32>
    %114 = vector.broadcast %110 : f32 to vector<2x256xf32>
    %115 = arith.mulf %114, %60 : vector<2x256xf32>
    %116 = arith.addf %113, %115 : vector<2x256xf32>
    %c5 = arith.constant 5 : index
    %117 = memref.load %arg5[%c5] : memref<98xf32, #tpu.memory_space<smem>>
    %c54 = arith.constant 54 : index
    %118 = memref.load %arg5[%c54] : memref<98xf32, #tpu.memory_space<smem>>
    %119 = vector.broadcast %117 : f32 to vector<2x256xf32>
    %120 = arith.mulf %119, %65 : vector<2x256xf32>
    %121 = arith.addf %116, %120 : vector<2x256xf32>
    %122 = vector.broadcast %118 : f32 to vector<2x256xf32>
    %123 = arith.mulf %122, %67 : vector<2x256xf32>
    %124 = arith.addf %121, %123 : vector<2x256xf32>
    %c6 = arith.constant 6 : index
    %125 = memref.load %arg5[%c6] : memref<98xf32, #tpu.memory_space<smem>>
    %c55 = arith.constant 55 : index
    %126 = memref.load %arg5[%c55] : memref<98xf32, #tpu.memory_space<smem>>
    %127 = vector.broadcast %125 : f32 to vector<2x256xf32>
    %128 = arith.mulf %127, %72 : vector<2x256xf32>
    %129 = arith.addf %124, %128 : vector<2x256xf32>
    %130 = vector.broadcast %126 : f32 to vector<2x256xf32>
    %131 = arith.mulf %130, %74 : vector<2x256xf32>
    %132 = arith.addf %129, %131 : vector<2x256xf32>
    %c48_i32 = arith.constant 48 : i32
    %133 = tpu.dynamic_rotate %132 by %c48_i32 dim 1 : vector<2x256xf32>, i32 -> vector<2x256xf32>
    %134 = vector.extract_strided_slice %3 {offsets = [7, 0], sizes = [1, 256], strides = [1, 1]} : vector<14x256xf32> to vector<1x256xf32>
    %135 = vector.broadcast %134 : vector<1x256xf32> to vector<2x256xf32>
    %136 = arith.mulf %133, %135 : vector<2x256xf32>
    %137 = arith.addf %75, %136 : vector<2x256xf32>
    %cst_26 = arith.constant 0.000000e+00 : f32
    %138 = vector.broadcast %cst_26 : f32 to vector<2x256xf32>
    %c7 = arith.constant 7 : index
    %139 = memref.load %arg5[%c7] : memref<98xf32, #tpu.memory_space<smem>>
    %c56 = arith.constant 56 : index
    %140 = memref.load %arg5[%c56] : memref<98xf32, #tpu.memory_space<smem>>
    %141 = vector.broadcast %139 : f32 to vector<2x256xf32>
    %142 = arith.mulf %141, %32 : vector<2x256xf32>
    %143 = arith.addf %138, %142 : vector<2x256xf32>
    %144 = vector.broadcast %140 : f32 to vector<2x256xf32>
    %145 = arith.mulf %144, %34 : vector<2x256xf32>
    %146 = arith.addf %143, %145 : vector<2x256xf32>
    %c8 = arith.constant 8 : index
    %147 = memref.load %arg5[%c8] : memref<98xf32, #tpu.memory_space<smem>>
    %c57 = arith.constant 57 : index
    %148 = memref.load %arg5[%c57] : memref<98xf32, #tpu.memory_space<smem>>
    %149 = vector.broadcast %147 : f32 to vector<2x256xf32>
    %150 = arith.mulf %149, %39 : vector<2x256xf32>
    %151 = arith.addf %146, %150 : vector<2x256xf32>
    %152 = vector.broadcast %148 : f32 to vector<2x256xf32>
    %153 = arith.mulf %152, %41 : vector<2x256xf32>
    %154 = arith.addf %151, %153 : vector<2x256xf32>
    %c9 = arith.constant 9 : index
    %155 = memref.load %arg5[%c9] : memref<98xf32, #tpu.memory_space<smem>>
    %c58 = arith.constant 58 : index
    %156 = memref.load %arg5[%c58] : memref<98xf32, #tpu.memory_space<smem>>
    %157 = vector.broadcast %155 : f32 to vector<2x256xf32>
    %158 = arith.mulf %157, %46 : vector<2x256xf32>
    %159 = arith.addf %154, %158 : vector<2x256xf32>
    %160 = vector.broadcast %156 : f32 to vector<2x256xf32>
    %161 = arith.mulf %160, %48 : vector<2x256xf32>
    %162 = arith.addf %159, %161 : vector<2x256xf32>
    %c10 = arith.constant 10 : index
    %163 = memref.load %arg5[%c10] : memref<98xf32, #tpu.memory_space<smem>>
    %c59 = arith.constant 59 : index
    %164 = memref.load %arg5[%c59] : memref<98xf32, #tpu.memory_space<smem>>
    %165 = vector.broadcast %163 : f32 to vector<2x256xf32>
    %166 = arith.mulf %165, %51 : vector<2x256xf32>
    %167 = arith.addf %162, %166 : vector<2x256xf32>
    %168 = vector.broadcast %164 : f32 to vector<2x256xf32>
    %169 = arith.mulf %168, %53 : vector<2x256xf32>
    %170 = arith.addf %167, %169 : vector<2x256xf32>
    %c11 = arith.constant 11 : index
    %171 = memref.load %arg5[%c11] : memref<98xf32, #tpu.memory_space<smem>>
    %c60 = arith.constant 60 : index
    %172 = memref.load %arg5[%c60] : memref<98xf32, #tpu.memory_space<smem>>
    %173 = vector.broadcast %171 : f32 to vector<2x256xf32>
    %174 = arith.mulf %173, %58 : vector<2x256xf32>
    %175 = arith.addf %170, %174 : vector<2x256xf32>
    %176 = vector.broadcast %172 : f32 to vector<2x256xf32>
    %177 = arith.mulf %176, %60 : vector<2x256xf32>
    %178 = arith.addf %175, %177 : vector<2x256xf32>
    %c12 = arith.constant 12 : index
    %179 = memref.load %arg5[%c12] : memref<98xf32, #tpu.memory_space<smem>>
    %c61 = arith.constant 61 : index
    %180 = memref.load %arg5[%c61] : memref<98xf32, #tpu.memory_space<smem>>
    %181 = vector.broadcast %179 : f32 to vector<2x256xf32>
    %182 = arith.mulf %181, %65 : vector<2x256xf32>
    %183 = arith.addf %178, %182 : vector<2x256xf32>
    %184 = vector.broadcast %180 : f32 to vector<2x256xf32>
    %185 = arith.mulf %184, %67 : vector<2x256xf32>
    %186 = arith.addf %183, %185 : vector<2x256xf32>
    %c13 = arith.constant 13 : index
    %187 = memref.load %arg5[%c13] : memref<98xf32, #tpu.memory_space<smem>>
    %c62 = arith.constant 62 : index
    %188 = memref.load %arg5[%c62] : memref<98xf32, #tpu.memory_space<smem>>
    %189 = vector.broadcast %187 : f32 to vector<2x256xf32>
    %190 = arith.mulf %189, %72 : vector<2x256xf32>
    %191 = arith.addf %186, %190 : vector<2x256xf32>
    %192 = vector.broadcast %188 : f32 to vector<2x256xf32>
    %193 = arith.mulf %192, %74 : vector<2x256xf32>
    %194 = arith.addf %191, %193 : vector<2x256xf32>
    %c32_i32 = arith.constant 32 : i32
    %195 = tpu.dynamic_rotate %194 by %c32_i32 dim 1 : vector<2x256xf32>, i32 -> vector<2x256xf32>
    %196 = vector.extract_strided_slice %3 {offsets = [8, 0], sizes = [1, 256], strides = [1, 1]} : vector<14x256xf32> to vector<1x256xf32>
    %197 = vector.broadcast %196 : vector<1x256xf32> to vector<2x256xf32>
    %198 = arith.mulf %195, %197 : vector<2x256xf32>
    %199 = arith.addf %137, %198 : vector<2x256xf32>
    %cst_27 = arith.constant 0.000000e+00 : f32
    %200 = vector.broadcast %cst_27 : f32 to vector<2x256xf32>
    %c14 = arith.constant 14 : index
    %201 = memref.load %arg5[%c14] : memref<98xf32, #tpu.memory_space<smem>>
    %c63 = arith.constant 63 : index
    %202 = memref.load %arg5[%c63] : memref<98xf32, #tpu.memory_space<smem>>
    %203 = vector.broadcast %201 : f32 to vector<2x256xf32>
    %204 = arith.mulf %203, %32 : vector<2x256xf32>
    %205 = arith.addf %200, %204 : vector<2x256xf32>
    %206 = vector.broadcast %202 : f32 to vector<2x256xf32>
    %207 = arith.mulf %206, %34 : vector<2x256xf32>
    %208 = arith.addf %205, %207 : vector<2x256xf32>
    %c15 = arith.constant 15 : index
    %209 = memref.load %arg5[%c15] : memref<98xf32, #tpu.memory_space<smem>>
    %c64 = arith.constant 64 : index
    %210 = memref.load %arg5[%c64] : memref<98xf32, #tpu.memory_space<smem>>
    %211 = vector.broadcast %209 : f32 to vector<2x256xf32>
    %212 = arith.mulf %211, %39 : vector<2x256xf32>
    %213 = arith.addf %208, %212 : vector<2x256xf32>
    %214 = vector.broadcast %210 : f32 to vector<2x256xf32>
    %215 = arith.mulf %214, %41 : vector<2x256xf32>
    %216 = arith.addf %213, %215 : vector<2x256xf32>
    %c16 = arith.constant 16 : index
    %217 = memref.load %arg5[%c16] : memref<98xf32, #tpu.memory_space<smem>>
    %c65 = arith.constant 65 : index
    %218 = memref.load %arg5[%c65] : memref<98xf32, #tpu.memory_space<smem>>
    %219 = vector.broadcast %217 : f32 to vector<2x256xf32>
    %220 = arith.mulf %219, %46 : vector<2x256xf32>
    %221 = arith.addf %216, %220 : vector<2x256xf32>
    %222 = vector.broadcast %218 : f32 to vector<2x256xf32>
    %223 = arith.mulf %222, %48 : vector<2x256xf32>
    %224 = arith.addf %221, %223 : vector<2x256xf32>
    %c17 = arith.constant 17 : index
    %225 = memref.load %arg5[%c17] : memref<98xf32, #tpu.memory_space<smem>>
    %c66 = arith.constant 66 : index
    %226 = memref.load %arg5[%c66] : memref<98xf32, #tpu.memory_space<smem>>
    %227 = vector.broadcast %225 : f32 to vector<2x256xf32>
    %228 = arith.mulf %227, %51 : vector<2x256xf32>
    %229 = arith.addf %224, %228 : vector<2x256xf32>
    %230 = vector.broadcast %226 : f32 to vector<2x256xf32>
    %231 = arith.mulf %230, %53 : vector<2x256xf32>
    %232 = arith.addf %229, %231 : vector<2x256xf32>
    %c18 = arith.constant 18 : index
    %233 = memref.load %arg5[%c18] : memref<98xf32, #tpu.memory_space<smem>>
    %c67 = arith.constant 67 : index
    %234 = memref.load %arg5[%c67] : memref<98xf32, #tpu.memory_space<smem>>
    %235 = vector.broadcast %233 : f32 to vector<2x256xf32>
    %236 = arith.mulf %235, %58 : vector<2x256xf32>
    %237 = arith.addf %232, %236 : vector<2x256xf32>
    %238 = vector.broadcast %234 : f32 to vector<2x256xf32>
    %239 = arith.mulf %238, %60 : vector<2x256xf32>
    %240 = arith.addf %237, %239 : vector<2x256xf32>
    %c19 = arith.constant 19 : index
    %241 = memref.load %arg5[%c19] : memref<98xf32, #tpu.memory_space<smem>>
    %c68 = arith.constant 68 : index
    %242 = memref.load %arg5[%c68] : memref<98xf32, #tpu.memory_space<smem>>
    %243 = vector.broadcast %241 : f32 to vector<2x256xf32>
    %244 = arith.mulf %243, %65 : vector<2x256xf32>
    %245 = arith.addf %240, %244 : vector<2x256xf32>
    %246 = vector.broadcast %242 : f32 to vector<2x256xf32>
    %247 = arith.mulf %246, %67 : vector<2x256xf32>
    %248 = arith.addf %245, %247 : vector<2x256xf32>
    %c20 = arith.constant 20 : index
    %249 = memref.load %arg5[%c20] : memref<98xf32, #tpu.memory_space<smem>>
    %c69 = arith.constant 69 : index
    %250 = memref.load %arg5[%c69] : memref<98xf32, #tpu.memory_space<smem>>
    %251 = vector.broadcast %249 : f32 to vector<2x256xf32>
    %252 = arith.mulf %251, %72 : vector<2x256xf32>
    %253 = arith.addf %248, %252 : vector<2x256xf32>
    %254 = vector.broadcast %250 : f32 to vector<2x256xf32>
    %255 = arith.mulf %254, %74 : vector<2x256xf32>
    %256 = arith.addf %253, %255 : vector<2x256xf32>
    %c16_i32 = arith.constant 16 : i32
    %257 = tpu.dynamic_rotate %256 by %c16_i32 dim 1 : vector<2x256xf32>, i32 -> vector<2x256xf32>
    %258 = vector.extract_strided_slice %3 {offsets = [9, 0], sizes = [1, 256], strides = [1, 1]} : vector<14x256xf32> to vector<1x256xf32>
    %259 = vector.broadcast %258 : vector<1x256xf32> to vector<2x256xf32>
    %260 = arith.mulf %257, %259 : vector<2x256xf32>
    %261 = arith.addf %199, %260 : vector<2x256xf32>
    %cst_28 = arith.constant 0.000000e+00 : f32
    %262 = vector.broadcast %cst_28 : f32 to vector<2x256xf32>
    %c21 = arith.constant 21 : index
    %263 = memref.load %arg5[%c21] : memref<98xf32, #tpu.memory_space<smem>>
    %c70 = arith.constant 70 : index
    %264 = memref.load %arg5[%c70] : memref<98xf32, #tpu.memory_space<smem>>
    %265 = vector.broadcast %263 : f32 to vector<2x256xf32>
    %266 = arith.mulf %265, %32 : vector<2x256xf32>
    %267 = arith.addf %262, %266 : vector<2x256xf32>
    %268 = vector.broadcast %264 : f32 to vector<2x256xf32>
    %269 = arith.mulf %268, %34 : vector<2x256xf32>
    %270 = arith.addf %267, %269 : vector<2x256xf32>
    %c22 = arith.constant 22 : index
    %271 = memref.load %arg5[%c22] : memref<98xf32, #tpu.memory_space<smem>>
    %c71 = arith.constant 71 : index
    %272 = memref.load %arg5[%c71] : memref<98xf32, #tpu.memory_space<smem>>
    %273 = vector.broadcast %271 : f32 to vector<2x256xf32>
    %274 = arith.mulf %273, %39 : vector<2x256xf32>
    %275 = arith.addf %270, %274 : vector<2x256xf32>
    %276 = vector.broadcast %272 : f32 to vector<2x256xf32>
    %277 = arith.mulf %276, %41 : vector<2x256xf32>
    %278 = arith.addf %275, %277 : vector<2x256xf32>
    %c23 = arith.constant 23 : index
    %279 = memref.load %arg5[%c23] : memref<98xf32, #tpu.memory_space<smem>>
    %c72 = arith.constant 72 : index
    %280 = memref.load %arg5[%c72] : memref<98xf32, #tpu.memory_space<smem>>
    %281 = vector.broadcast %279 : f32 to vector<2x256xf32>
    %282 = arith.mulf %281, %46 : vector<2x256xf32>
    %283 = arith.addf %278, %282 : vector<2x256xf32>
    %284 = vector.broadcast %280 : f32 to vector<2x256xf32>
    %285 = arith.mulf %284, %48 : vector<2x256xf32>
    %286 = arith.addf %283, %285 : vector<2x256xf32>
    %c24 = arith.constant 24 : index
    %287 = memref.load %arg5[%c24] : memref<98xf32, #tpu.memory_space<smem>>
    %c73 = arith.constant 73 : index
    %288 = memref.load %arg5[%c73] : memref<98xf32, #tpu.memory_space<smem>>
    %289 = vector.broadcast %287 : f32 to vector<2x256xf32>
    %290 = arith.mulf %289, %51 : vector<2x256xf32>
    %291 = arith.addf %286, %290 : vector<2x256xf32>
    %292 = vector.broadcast %288 : f32 to vector<2x256xf32>
    %293 = arith.mulf %292, %53 : vector<2x256xf32>
    %294 = arith.addf %291, %293 : vector<2x256xf32>
    %c25 = arith.constant 25 : index
    %295 = memref.load %arg5[%c25] : memref<98xf32, #tpu.memory_space<smem>>
    %c74 = arith.constant 74 : index
    %296 = memref.load %arg5[%c74] : memref<98xf32, #tpu.memory_space<smem>>
    %297 = vector.broadcast %295 : f32 to vector<2x256xf32>
    %298 = arith.mulf %297, %58 : vector<2x256xf32>
    %299 = arith.addf %294, %298 : vector<2x256xf32>
    %300 = vector.broadcast %296 : f32 to vector<2x256xf32>
    %301 = arith.mulf %300, %60 : vector<2x256xf32>
    %302 = arith.addf %299, %301 : vector<2x256xf32>
    %c26 = arith.constant 26 : index
    %303 = memref.load %arg5[%c26] : memref<98xf32, #tpu.memory_space<smem>>
    %c75 = arith.constant 75 : index
    %304 = memref.load %arg5[%c75] : memref<98xf32, #tpu.memory_space<smem>>
    %305 = vector.broadcast %303 : f32 to vector<2x256xf32>
    %306 = arith.mulf %305, %65 : vector<2x256xf32>
    %307 = arith.addf %302, %306 : vector<2x256xf32>
    %308 = vector.broadcast %304 : f32 to vector<2x256xf32>
    %309 = arith.mulf %308, %67 : vector<2x256xf32>
    %310 = arith.addf %307, %309 : vector<2x256xf32>
    %c27 = arith.constant 27 : index
    %311 = memref.load %arg5[%c27] : memref<98xf32, #tpu.memory_space<smem>>
    %c76 = arith.constant 76 : index
    %312 = memref.load %arg5[%c76] : memref<98xf32, #tpu.memory_space<smem>>
    %313 = vector.broadcast %311 : f32 to vector<2x256xf32>
    %314 = arith.mulf %313, %72 : vector<2x256xf32>
    %315 = arith.addf %310, %314 : vector<2x256xf32>
    %316 = vector.broadcast %312 : f32 to vector<2x256xf32>
    %317 = arith.mulf %316, %74 : vector<2x256xf32>
    %318 = arith.addf %315, %317 : vector<2x256xf32>
    %319 = vector.extract_strided_slice %3 {offsets = [10, 0], sizes = [1, 256], strides = [1, 1]} : vector<14x256xf32> to vector<1x256xf32>
    %320 = vector.broadcast %319 : vector<1x256xf32> to vector<2x256xf32>
    %321 = arith.mulf %318, %320 : vector<2x256xf32>
    %322 = arith.addf %261, %321 : vector<2x256xf32>
    %cst_29 = arith.constant 0.000000e+00 : f32
    %323 = vector.broadcast %cst_29 : f32 to vector<2x256xf32>
    %c28 = arith.constant 28 : index
    %324 = memref.load %arg5[%c28] : memref<98xf32, #tpu.memory_space<smem>>
    %c77 = arith.constant 77 : index
    %325 = memref.load %arg5[%c77] : memref<98xf32, #tpu.memory_space<smem>>
    %326 = vector.broadcast %324 : f32 to vector<2x256xf32>
    %327 = arith.mulf %326, %32 : vector<2x256xf32>
    %328 = arith.addf %323, %327 : vector<2x256xf32>
    %329 = vector.broadcast %325 : f32 to vector<2x256xf32>
    %330 = arith.mulf %329, %34 : vector<2x256xf32>
    %331 = arith.addf %328, %330 : vector<2x256xf32>
    %c29 = arith.constant 29 : index
    %332 = memref.load %arg5[%c29] : memref<98xf32, #tpu.memory_space<smem>>
    %c78 = arith.constant 78 : index
    %333 = memref.load %arg5[%c78] : memref<98xf32, #tpu.memory_space<smem>>
    %334 = vector.broadcast %332 : f32 to vector<2x256xf32>
    %335 = arith.mulf %334, %39 : vector<2x256xf32>
    %336 = arith.addf %331, %335 : vector<2x256xf32>
    %337 = vector.broadcast %333 : f32 to vector<2x256xf32>
    %338 = arith.mulf %337, %41 : vector<2x256xf32>
    %339 = arith.addf %336, %338 : vector<2x256xf32>
    %c30 = arith.constant 30 : index
    %340 = memref.load %arg5[%c30] : memref<98xf32, #tpu.memory_space<smem>>
    %c79 = arith.constant 79 : index
    %341 = memref.load %arg5[%c79] : memref<98xf32, #tpu.memory_space<smem>>
    %342 = vector.broadcast %340 : f32 to vector<2x256xf32>
    %343 = arith.mulf %342, %46 : vector<2x256xf32>
    %344 = arith.addf %339, %343 : vector<2x256xf32>
    %345 = vector.broadcast %341 : f32 to vector<2x256xf32>
    %346 = arith.mulf %345, %48 : vector<2x256xf32>
    %347 = arith.addf %344, %346 : vector<2x256xf32>
    %c31 = arith.constant 31 : index
    %348 = memref.load %arg5[%c31] : memref<98xf32, #tpu.memory_space<smem>>
    %c80 = arith.constant 80 : index
    %349 = memref.load %arg5[%c80] : memref<98xf32, #tpu.memory_space<smem>>
    %350 = vector.broadcast %348 : f32 to vector<2x256xf32>
    %351 = arith.mulf %350, %51 : vector<2x256xf32>
    %352 = arith.addf %347, %351 : vector<2x256xf32>
    %353 = vector.broadcast %349 : f32 to vector<2x256xf32>
    %354 = arith.mulf %353, %53 : vector<2x256xf32>
    %355 = arith.addf %352, %354 : vector<2x256xf32>
    %c32 = arith.constant 32 : index
    %356 = memref.load %arg5[%c32] : memref<98xf32, #tpu.memory_space<smem>>
    %c81 = arith.constant 81 : index
    %357 = memref.load %arg5[%c81] : memref<98xf32, #tpu.memory_space<smem>>
    %358 = vector.broadcast %356 : f32 to vector<2x256xf32>
    %359 = arith.mulf %358, %58 : vector<2x256xf32>
    %360 = arith.addf %355, %359 : vector<2x256xf32>
    %361 = vector.broadcast %357 : f32 to vector<2x256xf32>
    %362 = arith.mulf %361, %60 : vector<2x256xf32>
    %363 = arith.addf %360, %362 : vector<2x256xf32>
    %c33 = arith.constant 33 : index
    %364 = memref.load %arg5[%c33] : memref<98xf32, #tpu.memory_space<smem>>
    %c82 = arith.constant 82 : index
    %365 = memref.load %arg5[%c82] : memref<98xf32, #tpu.memory_space<smem>>
    %366 = vector.broadcast %364 : f32 to vector<2x256xf32>
    %367 = arith.mulf %366, %65 : vector<2x256xf32>
    %368 = arith.addf %363, %367 : vector<2x256xf32>
    %369 = vector.broadcast %365 : f32 to vector<2x256xf32>
    %370 = arith.mulf %369, %67 : vector<2x256xf32>
    %371 = arith.addf %368, %370 : vector<2x256xf32>
    %c34 = arith.constant 34 : index
    %372 = memref.load %arg5[%c34] : memref<98xf32, #tpu.memory_space<smem>>
    %c83 = arith.constant 83 : index
    %373 = memref.load %arg5[%c83] : memref<98xf32, #tpu.memory_space<smem>>
    %374 = vector.broadcast %372 : f32 to vector<2x256xf32>
    %375 = arith.mulf %374, %72 : vector<2x256xf32>
    %376 = arith.addf %371, %375 : vector<2x256xf32>
    %377 = vector.broadcast %373 : f32 to vector<2x256xf32>
    %378 = arith.mulf %377, %74 : vector<2x256xf32>
    %379 = arith.addf %376, %378 : vector<2x256xf32>
    %c240_i32 = arith.constant 240 : i32
    %380 = tpu.dynamic_rotate %379 by %c240_i32 dim 1 : vector<2x256xf32>, i32 -> vector<2x256xf32>
    %381 = vector.extract_strided_slice %3 {offsets = [11, 0], sizes = [1, 256], strides = [1, 1]} : vector<14x256xf32> to vector<1x256xf32>
    %382 = vector.broadcast %381 : vector<1x256xf32> to vector<2x256xf32>
    %383 = arith.mulf %380, %382 : vector<2x256xf32>
    %384 = arith.addf %322, %383 : vector<2x256xf32>
    %cst_30 = arith.constant 0.000000e+00 : f32
    %385 = vector.broadcast %cst_30 : f32 to vector<2x256xf32>
    %c35 = arith.constant 35 : index
    %386 = memref.load %arg5[%c35] : memref<98xf32, #tpu.memory_space<smem>>
    %c84 = arith.constant 84 : index
    %387 = memref.load %arg5[%c84] : memref<98xf32, #tpu.memory_space<smem>>
    %388 = vector.broadcast %386 : f32 to vector<2x256xf32>
    %389 = arith.mulf %388, %32 : vector<2x256xf32>
    %390 = arith.addf %385, %389 : vector<2x256xf32>
    %391 = vector.broadcast %387 : f32 to vector<2x256xf32>
    %392 = arith.mulf %391, %34 : vector<2x256xf32>
    %393 = arith.addf %390, %392 : vector<2x256xf32>
    %c36 = arith.constant 36 : index
    %394 = memref.load %arg5[%c36] : memref<98xf32, #tpu.memory_space<smem>>
    %c85 = arith.constant 85 : index
    %395 = memref.load %arg5[%c85] : memref<98xf32, #tpu.memory_space<smem>>
    %396 = vector.broadcast %394 : f32 to vector<2x256xf32>
    %397 = arith.mulf %396, %39 : vector<2x256xf32>
    %398 = arith.addf %393, %397 : vector<2x256xf32>
    %399 = vector.broadcast %395 : f32 to vector<2x256xf32>
    %400 = arith.mulf %399, %41 : vector<2x256xf32>
    %401 = arith.addf %398, %400 : vector<2x256xf32>
    %c37 = arith.constant 37 : index
    %402 = memref.load %arg5[%c37] : memref<98xf32, #tpu.memory_space<smem>>
    %c86 = arith.constant 86 : index
    %403 = memref.load %arg5[%c86] : memref<98xf32, #tpu.memory_space<smem>>
    %404 = vector.broadcast %402 : f32 to vector<2x256xf32>
    %405 = arith.mulf %404, %46 : vector<2x256xf32>
    %406 = arith.addf %401, %405 : vector<2x256xf32>
    %407 = vector.broadcast %403 : f32 to vector<2x256xf32>
    %408 = arith.mulf %407, %48 : vector<2x256xf32>
    %409 = arith.addf %406, %408 : vector<2x256xf32>
    %c38 = arith.constant 38 : index
    %410 = memref.load %arg5[%c38] : memref<98xf32, #tpu.memory_space<smem>>
    %c87 = arith.constant 87 : index
    %411 = memref.load %arg5[%c87] : memref<98xf32, #tpu.memory_space<smem>>
    %412 = vector.broadcast %410 : f32 to vector<2x256xf32>
    %413 = arith.mulf %412, %51 : vector<2x256xf32>
    %414 = arith.addf %409, %413 : vector<2x256xf32>
    %415 = vector.broadcast %411 : f32 to vector<2x256xf32>
    %416 = arith.mulf %415, %53 : vector<2x256xf32>
    %417 = arith.addf %414, %416 : vector<2x256xf32>
    %c39 = arith.constant 39 : index
    %418 = memref.load %arg5[%c39] : memref<98xf32, #tpu.memory_space<smem>>
    %c88 = arith.constant 88 : index
    %419 = memref.load %arg5[%c88] : memref<98xf32, #tpu.memory_space<smem>>
    %420 = vector.broadcast %418 : f32 to vector<2x256xf32>
    %421 = arith.mulf %420, %58 : vector<2x256xf32>
    %422 = arith.addf %417, %421 : vector<2x256xf32>
    %423 = vector.broadcast %419 : f32 to vector<2x256xf32>
    %424 = arith.mulf %423, %60 : vector<2x256xf32>
    %425 = arith.addf %422, %424 : vector<2x256xf32>
    %c40 = arith.constant 40 : index
    %426 = memref.load %arg5[%c40] : memref<98xf32, #tpu.memory_space<smem>>
    %c89 = arith.constant 89 : index
    %427 = memref.load %arg5[%c89] : memref<98xf32, #tpu.memory_space<smem>>
    %428 = vector.broadcast %426 : f32 to vector<2x256xf32>
    %429 = arith.mulf %428, %65 : vector<2x256xf32>
    %430 = arith.addf %425, %429 : vector<2x256xf32>
    %431 = vector.broadcast %427 : f32 to vector<2x256xf32>
    %432 = arith.mulf %431, %67 : vector<2x256xf32>
    %433 = arith.addf %430, %432 : vector<2x256xf32>
    %c41 = arith.constant 41 : index
    %434 = memref.load %arg5[%c41] : memref<98xf32, #tpu.memory_space<smem>>
    %c90 = arith.constant 90 : index
    %435 = memref.load %arg5[%c90] : memref<98xf32, #tpu.memory_space<smem>>
    %436 = vector.broadcast %434 : f32 to vector<2x256xf32>
    %437 = arith.mulf %436, %72 : vector<2x256xf32>
    %438 = arith.addf %433, %437 : vector<2x256xf32>
    %439 = vector.broadcast %435 : f32 to vector<2x256xf32>
    %440 = arith.mulf %439, %74 : vector<2x256xf32>
    %441 = arith.addf %438, %440 : vector<2x256xf32>
    %c224_i32 = arith.constant 224 : i32
    %442 = tpu.dynamic_rotate %441 by %c224_i32 dim 1 : vector<2x256xf32>, i32 -> vector<2x256xf32>
    %443 = vector.extract_strided_slice %3 {offsets = [12, 0], sizes = [1, 256], strides = [1, 1]} : vector<14x256xf32> to vector<1x256xf32>
    %444 = vector.broadcast %443 : vector<1x256xf32> to vector<2x256xf32>
    %445 = arith.mulf %442, %444 : vector<2x256xf32>
    %446 = arith.addf %384, %445 : vector<2x256xf32>
    %cst_31 = arith.constant 0.000000e+00 : f32
    %447 = vector.broadcast %cst_31 : f32 to vector<2x256xf32>
    %c42 = arith.constant 42 : index
    %448 = memref.load %arg5[%c42] : memref<98xf32, #tpu.memory_space<smem>>
    %c91 = arith.constant 91 : index
    %449 = memref.load %arg5[%c91] : memref<98xf32, #tpu.memory_space<smem>>
    %450 = vector.broadcast %448 : f32 to vector<2x256xf32>
    %451 = arith.mulf %450, %32 : vector<2x256xf32>
    %452 = arith.addf %447, %451 : vector<2x256xf32>
    %453 = vector.broadcast %449 : f32 to vector<2x256xf32>
    %454 = arith.mulf %453, %34 : vector<2x256xf32>
    %455 = arith.addf %452, %454 : vector<2x256xf32>
    %c43 = arith.constant 43 : index
    %456 = memref.load %arg5[%c43] : memref<98xf32, #tpu.memory_space<smem>>
    %c92 = arith.constant 92 : index
    %457 = memref.load %arg5[%c92] : memref<98xf32, #tpu.memory_space<smem>>
    %458 = vector.broadcast %456 : f32 to vector<2x256xf32>
    %459 = arith.mulf %458, %39 : vector<2x256xf32>
    %460 = arith.addf %455, %459 : vector<2x256xf32>
    %461 = vector.broadcast %457 : f32 to vector<2x256xf32>
    %462 = arith.mulf %461, %41 : vector<2x256xf32>
    %463 = arith.addf %460, %462 : vector<2x256xf32>
    %c44 = arith.constant 44 : index
    %464 = memref.load %arg5[%c44] : memref<98xf32, #tpu.memory_space<smem>>
    %c93 = arith.constant 93 : index
    %465 = memref.load %arg5[%c93] : memref<98xf32, #tpu.memory_space<smem>>
    %466 = vector.broadcast %464 : f32 to vector<2x256xf32>
    %467 = arith.mulf %466, %46 : vector<2x256xf32>
    %468 = arith.addf %463, %467 : vector<2x256xf32>
    %469 = vector.broadcast %465 : f32 to vector<2x256xf32>
    %470 = arith.mulf %469, %48 : vector<2x256xf32>
    %471 = arith.addf %468, %470 : vector<2x256xf32>
    %c45 = arith.constant 45 : index
    %472 = memref.load %arg5[%c45] : memref<98xf32, #tpu.memory_space<smem>>
    %c94 = arith.constant 94 : index
    %473 = memref.load %arg5[%c94] : memref<98xf32, #tpu.memory_space<smem>>
    %474 = vector.broadcast %472 : f32 to vector<2x256xf32>
    %475 = arith.mulf %474, %51 : vector<2x256xf32>
    %476 = arith.addf %471, %475 : vector<2x256xf32>
    %477 = vector.broadcast %473 : f32 to vector<2x256xf32>
    %478 = arith.mulf %477, %53 : vector<2x256xf32>
    %479 = arith.addf %476, %478 : vector<2x256xf32>
    %c46 = arith.constant 46 : index
    %480 = memref.load %arg5[%c46] : memref<98xf32, #tpu.memory_space<smem>>
    %c95 = arith.constant 95 : index
    %481 = memref.load %arg5[%c95] : memref<98xf32, #tpu.memory_space<smem>>
    %482 = vector.broadcast %480 : f32 to vector<2x256xf32>
    %483 = arith.mulf %482, %58 : vector<2x256xf32>
    %484 = arith.addf %479, %483 : vector<2x256xf32>
    %485 = vector.broadcast %481 : f32 to vector<2x256xf32>
    %486 = arith.mulf %485, %60 : vector<2x256xf32>
    %487 = arith.addf %484, %486 : vector<2x256xf32>
    %c47 = arith.constant 47 : index
    %488 = memref.load %arg5[%c47] : memref<98xf32, #tpu.memory_space<smem>>
    %c96 = arith.constant 96 : index
    %489 = memref.load %arg5[%c96] : memref<98xf32, #tpu.memory_space<smem>>
    %490 = vector.broadcast %488 : f32 to vector<2x256xf32>
    %491 = arith.mulf %490, %65 : vector<2x256xf32>
    %492 = arith.addf %487, %491 : vector<2x256xf32>
    %493 = vector.broadcast %489 : f32 to vector<2x256xf32>
    %494 = arith.mulf %493, %67 : vector<2x256xf32>
    %495 = arith.addf %492, %494 : vector<2x256xf32>
    %c48 = arith.constant 48 : index
    %496 = memref.load %arg5[%c48] : memref<98xf32, #tpu.memory_space<smem>>
    %c97 = arith.constant 97 : index
    %497 = memref.load %arg5[%c97] : memref<98xf32, #tpu.memory_space<smem>>
    %498 = vector.broadcast %496 : f32 to vector<2x256xf32>
    %499 = arith.mulf %498, %72 : vector<2x256xf32>
    %500 = arith.addf %495, %499 : vector<2x256xf32>
    %501 = vector.broadcast %497 : f32 to vector<2x256xf32>
    %502 = arith.mulf %501, %74 : vector<2x256xf32>
    %503 = arith.addf %500, %502 : vector<2x256xf32>
    %c208_i32 = arith.constant 208 : i32
    %504 = tpu.dynamic_rotate %503 by %c208_i32 dim 1 : vector<2x256xf32>, i32 -> vector<2x256xf32>
    %505 = vector.extract_strided_slice %3 {offsets = [13, 0], sizes = [1, 256], strides = [1, 1]} : vector<14x256xf32> to vector<1x256xf32>
    %506 = vector.broadcast %505 : vector<1x256xf32> to vector<2x256xf32>
    %507 = arith.mulf %504, %506 : vector<2x256xf32>
    %508 = arith.addf %446, %507 : vector<2x256xf32>
    %c0_32 = arith.constant 0 : index
    %509 = memref.load %arg6[%c0_32] : memref<1xf32, #tpu.memory_space<smem>>
    %510 = vector.broadcast %509 : f32 to vector<2x256xf32>
    %511 = arith.addf %508, %510 : vector<2x256xf32>
    %512 = arith.negf %511 : vector<2x256xf32>
    %513 = math.exp %512 : vector<2x256xf32>
    %cst_33 = arith.constant 1.000000e+00 : f32
    %514 = vector.broadcast %cst_33 : f32 to vector<2x256xf32>
    %515 = arith.addf %514, %513 : vector<2x256xf32>
    %516 = arith.divf %514, %515 : vector<2x256xf32>
    %517 = vector.shape_cast %20 : vector<2x16xf32> to vector<2x16x1xf32>
    %518 = vector.shape_cast %516 : vector<2x256xf32> to vector<2x1x256xf32>
    %519 = vector.broadcast %517 : vector<2x16x1xf32> to vector<2x16x256xf32>
    %520 = vector.broadcast %518 : vector<2x1x256xf32> to vector<2x16x256xf32>
    %521 = arith.mulf %519, %520 : vector<2x16x256xf32>
    %cst_34 = arith.constant 1.000000e+00 : f32
    %522 = vector.broadcast %cst_34 : f32 to vector<2x16x256xf32>
    %523 = arith.addf %522, %521 : vector<2x16x256xf32>
    %524 = arith.mulf %0, %523 : vector<2x16x256xf32>
    %c0_35 = arith.constant 0 : index
    %c0_36 = arith.constant 0 : index
    %c0_37 = arith.constant 0 : index
    %525 = vector.load %arg7[%c0_35, %c0_36, %c0_37] : memref<2x16x256xf32, #tpu.memory_space<vmem>>, vector<2x16x256xf32>
    tpu.vector_store %arg7[%c0_35, %c0_36, %c0_37], %524 {strides = array<i32>} : memref<2x16x256xf32, #tpu.memory_space<vmem>>, vector<2x16x256xf32>,
    return
  }
  func.func @transform_0(%arg0: i32) -> (i32, i32, i32) {
    %c0_i32 = arith.constant 0 : i32
    %c0_i32_0 = arith.constant 0 : i32
    %c0_i32_1 = arith.constant 0 : i32
    return %arg0, %c0_i32, %c0_i32_0 : i32, i32, i32
  }
  func.func @transform_1(%arg0: i32) -> (i32, i32) {
    %c0_i32 = arith.constant 0 : i32
    %c0_i32_0 = arith.constant 0 : i32
    %c0_i32_1 = arith.constant 0 : i32
    return %c0_i32, %c0_i32_0 : i32, i32
  }
  func.func @transform_2(%arg0: i32) -> (i32, i32) {
    %c0_i32 = arith.constant 0 : i32
    %c0_i32_0 = arith.constant 0 : i32
    %c0_i32_1 = arith.constant 0 : i32
    return %c0_i32, %c0_i32_0 : i32, i32
  }
  func.func @transform_3(%arg0: i32) -> (i32, i32) {
    %c0_i32 = arith.constant 0 : i32
    %c0_i32_0 = arith.constant 0 : i32
    %c0_i32_1 = arith.constant 0 : i32
    return %c0_i32, %c0_i32_0 : i32, i32
  }
  func.func @transform_4(%arg0: i32) -> i32 {
    %c0_i32 = arith.constant 0 : i32
    %c0_i32_0 = arith.constant 0 : i32
    return %c0_i32 : i32
  }
  func.func @transform_5(%arg0: i32) -> i32 {
    %c0_i32 = arith.constant 0 : i32
    %c0_i32_0 = arith.constant 0 : i32
    return %c0_i32 : i32
  }
  func.func @transform_6(%arg0: i32) -> (i32, i32, i32) {
    %c0_i32 = arith.constant 0 : i32
    %c0_i32_0 = arith.constant 0 : i32
    %c0_i32_1 = arith.constant 0 : i32
    return %arg0, %c0_i32, %c0_i32_0 : i32, i32, i32
  }
}

</mosaic_0001>

<llo_original>
// kernel: tpu_custom_call.1
$region0: #{tpu_custom_call.1}
  #allocation0 [shape = 'u32[]', space=smem, size = 0x4, offset = 0x4, fixed_abs, tag = 'smem constant byte address 0x4 - core index']
  #allocation1 [shape = 'u32[144,128]{1,0:T(1,128)}', space=vmem, size = 0x12000, scoped, tag = 'internal scratch']
  #allocation2 [shape = 'f32[1]{0:T(128)S(6)}', space=smem, size = 0x200, scoped, tag = 'scoped memory for tpu_custom_call.1']
  %s0 = inlined_call_operand.hbm [shape: f32[2,16,256], index: 0, kind: input, shape index: {}]
  %s1 = inlined_call_operand.vmem [shape: f32[16,4], index: 1, kind: input, shape index: {}]
  %s2 = inlined_call_operand.hbm [shape: f32[4,16], index: 2, kind: input, shape index: {}]
  %s3 = inlined_call_operand.vmem [shape: f32[14,256], index: 3, kind: input, shape index: {}]
  %s4 = inlined_call_operand.vmem [shape: f32[98], index: 4, kind: input, shape index: {}]
  %s5 = inlined_call_operand.<no memory space> [shape: f32[1], index: 5, kind: input, shape index: {}]
  %s6 = inlined_call_operand.hbm [shape: f32[2,16,256], index: 6, kind: output, shape index: {}]
  %s7 = sld [smem:[#allocation0]]
  $region46: #{tpu_custom_call.1} parent=0
    _
  %s9 = ssub.s32 1, %s7
  %s10 = scalar_select 0, %s9, %s7
  %11 = sst [smem:[#allocation2]] %s5
  $region1: #{tpu_custom_call.1} parent=0
    #allocation3 [shape = 'u8[32768]{0}', space=vmem, size = 0x8000, scoped, tag = 'input window, operand 0, single buffered']
    #allocation4 [shape = 's32[1]{0}', space=sflag, size = 0x4, scoped, tag = 'scoped memory for tpu_custom_call.1']
    #allocation5 [shape = 's32[1]{0}', space=sflag, size = 0x4, scoped, tag = 'scoped memory for tpu_custom_call.1']
    #allocation6 [shape = 's32[1]{0}', space=sflag, size = 0x4, scoped, tag = 'scoped memory for tpu_custom_call.1']
    #allocation7 [shape = 'u8[2048]{0}', space=vmem, size = 0x800, scoped, tag = 'input window, operand 2, single buffered']
    #allocation8 [shape = 's32[1]{0}', space=sflag, size = 0x4, scoped, tag = 'scoped memory for tpu_custom_call.1']
    #allocation9 [shape = 'u8[512]{0}', space=smem, size = 0x200, scoped, tag = 'input window, operand 4, single buffered']
    #allocation10 [shape = 'u8[32768]{0}', space=vmem, size = 0x8000, scoped, tag = 'output window, operand 0, single buffered']
    %12 = vsyncpa [#allocation4], 0
    %13 = vsyncpa [#allocation8], 0
    %14 = vsyncpa [#allocation6], 0
    %15 = vsyncpa [#allocation5], 0
    // Predicated region
    $region2: #{tpu_custom_call.1} parent=1 // pred_check
      _
    $region3: #{tpu_custom_call.1} parent=1 // pred_check_branch
      %17 = sbr.rel (0) target = $region5
    $region4: #{tpu_custom_call.1} parent=1 // pred_region
      %s19 = ssub.s32 1024, 1024
      %20 = vsyncadd [#allocation4], %s19
      %s21 = sshll.u32 [#allocation3], 4
      %s22 = int_to_ptr.vmem [resolvable:$true] %s21
      %27 = dma.hbm_to_vmem [thread:$0]  %s0, 1024, %s22, [#allocation4], 256, 256, 16
    $region5: #{tpu_custom_call.1} parent=1 // pred_fallthru
      _
    // Predicated region
    $region6: #{tpu_custom_call.1} parent=1 // pred_check
      _
    $region7: #{tpu_custom_call.1} parent=1 // pred_check_branch
      %29 = sbr.rel (0) target = $region9
    $region8: #{tpu_custom_call.1} parent=1 // pred_region
      _
    $region9: #{tpu_custom_call.1} parent=1 // pred_fallthru
      _
    // Predicated region
    $region10: #{tpu_custom_call.1} parent=1 // pred_check
      _
    $region11: #{tpu_custom_call.1} parent=1 // pred_check_branch
      %31 = sbr.rel (0) target = $region13
    $region12: #{tpu_custom_call.1} parent=1 // pred_region
      %s33 = ssub.s32 64, 64
      %34 = vsyncadd [#allocation8], %s33
      %s36 = sshll.u32 [#allocation7], 4
      %s37 = int_to_ptr.vmem [resolvable:$true] %s36
      %39 = dma.hbm_to_vmem [thread:$0]  %s2, 64, %s37, [#allocation8]
    $region13: #{tpu_custom_call.1} parent=1 // pred_fallthru
      _
    // Predicated region
    $region14: #{tpu_custom_call.1} parent=1 // pred_check
      _
    $region15: #{tpu_custom_call.1} parent=1 // pred_check_branch
      %41 = sbr.rel (0) target = $region17
    $region16: #{tpu_custom_call.1} parent=1 // pred_region
      _
    $region17: #{tpu_custom_call.1} parent=1 // pred_fallthru
      _
    // Predicated region
    $region18: #{tpu_custom_call.1} parent=1 // pred_check
      _
    $region19: #{tpu_custom_call.1} parent=1 // pred_check_branch
      %43 = sbr.rel (0) target = $region21
    $region20: #{tpu_custom_call.1} parent=1 // pred_region
      %s45 = ssub.s32 16, 16
      %46 = vsyncadd [#allocation6], %s45
      %s48 = sshll.u32 %s4, 4
      %s49 = int_to_ptr.vmem [resolvable:$true] %s48
      %51 = dma.vmem_to_smem %s49, 16, [#allocation9], [#allocation6]
    $region21: #{tpu_custom_call.1} parent=1 // pred_fallthru
      _
    // Predicated region
    $region22: #{tpu_custom_call.1} parent=1 // pred_check
      _
    $region23: #{tpu_custom_call.1} parent=1 // pred_check_branch
      %53 = sbr.rel (0) target = $region25
    $region24: #{tpu_custom_call.1} parent=1 // pred_region
      _
    $region25: #{tpu_custom_call.1} parent=1 // pred_fallthru
      _
    // Predicated region
    $region26: #{tpu_custom_call.1} parent=1 // pred_check
      _
    $region27: #{tpu_custom_call.1} parent=1 // pred_check_branch
      %55 = sbr.rel (0) target = $region29
    $region28: #{tpu_custom_call.1} parent=1 // pred_region
      %56 = dma.done [#allocation4], 1024
    $region29: #{tpu_custom_call.1} parent=1 // pred_fallthru
      _
    // Predicated region
    $region30: #{tpu_custom_call.1} parent=1 // pred_check
      _
    $region31: #{tpu_custom_call.1} parent=1 // pred_check_branch
      %58 = sbr.rel (0) target = $region33
    $region32: #{tpu_custom_call.1} parent=1 // pred_region
      %59 = dma.done [#allocation8], 64
    $region33: #{tpu_custom_call.1} parent=1 // pred_fallthru
      _
    // Predicated region
    $region34: #{tpu_custom_call.1} parent=1 // pred_check
      _
    $region35: #{tpu_custom_call.1} parent=1 // pred_check_branch
      %61 = sbr.rel (0) target = $region37
    $region36: #{tpu_custom_call.1} parent=1 // pred_region
      %62 = dma.done [#allocation6], 16
    $region37: #{tpu_custom_call.1} parent=1 // pred_fallthru
      _
    %63 = sfence
    %v64 = vld [vmem:[#allocation3] sm:$0xff]
    %v65 = vld [vmem:[#allocation3 + $0x8] sm:$0xff]
    %v66 = vld [vmem:[#allocation3 + $0x10] sm:$0xff]
    %v67 = vld [vmem:[#allocation3 + $0x18] sm:$0xff]
    %v68 = vld [vmem:[#allocation3 + $0x20] sm:$0xff]
    %v69 = vld [vmem:[#allocation3 + $0x28] sm:$0xff]
    %v70 = vld [vmem:[#allocation3 + $0x30] sm:$0xff]
    %v71 = vld [vmem:[#allocation3 + $0x38] sm:$0xff]
    %v72 = vld [vmem:[%s1] sm:$0xff]
    %v73 = vld [vmem:[%s1 + $0x8] sm:$0xff]
    %v74 = vld [vmem:[#allocation7] sm:$0xf]
    %v75 = vld [vmem:[%s3] sm:$0xff]
    %v76 = vld [vmem:[%s3 + $0x8] sm:$0xff]
    %v77 = vld [vmem:[%s3 + $0x10] sm:$0x3f]
    %v78 = vld [vmem:[%s3 + $0x18] sm:$0x3f]
    %v79 = vmax.f32 %v64, %v65
    %80 = vmax.xlane.f32.xlu0 %v79
    %v81 = vpop.xlane.xlu0 %80
    %v82 = vmax.f32 %v66, %v67
    %83 = vmax.xlane.f32.xlu0 %v82
    %v84 = vpop.xlane.xlu0 %83
    %v85 = vmax.f32 %v68, %v69
    %86 = vmax.xlane.f32.xlu0 %v85
    %v87 = vpop.xlane.xlu0 %86
    %v88 = vmax.f32 %v70, %v71
    %89 = vmax.xlane.f32.xlu0 %v88
    %v90 = vpop.xlane.xlu0 %89
    %v91 = vadd.f32 %v64, %v65
    %92 = vadd.xlane.f32.xlu0 %v91
    %v93 = vpop.xlane.xlu0 %92
    %v94 = vadd.f32 %v66, %v67
    %95 = vadd.xlane.f32.xlu0 %v94
    %v96 = vpop.xlane.xlu0 %95
    %v97 = vadd.f32 %v68, %v69
    %98 = vadd.xlane.f32.xlu0 %v97
    %v99 = vpop.xlane.xlu0 %98
    %v100 = vadd.f32 %v70, %v71
    %101 = vadd.xlane.f32.xlu0 %v100
    %v102 = vpop.xlane.xlu0 %101
    %v103 = vmul.f32 %v93, 0.00390625
    %v104 = vmul.f32 %v96, 0.00390625
    %v105 = vmul.f32 %v99, 0.00390625
    %v106 = vmul.f32 %v102, 0.00390625
    %v111 = vlaneseq
    %v112 = vand.u32 %v111, 127
    %v113 = vlaneseq
    %v114 = vshrl.u32 %v113, 7
    %v115 = vsub.s32 %v112, %v114
    %v116 = vrot.slane %v81, %v115
    %v117 = vadd.s32 %v112, 4294967288
    %v118 = vlaneseq
    %v119 = vshrl.u32 %v118, 7
    %v120 = vsub.s32 %v117, %v119
    %v121 = vrot.slane %v84, %v120
    %vm122 = vcmask 130112
    %v123 = vsel %vm122, %v121, %v116
    %v124 = vlaneseq
    %v125 = vshrl.u32 %v124, 7
    %v126 = vsub.s32 %v112, %v125
    %v127 = vrot.slane %v87, %v126
    %v128 = vlaneseq
    %v129 = vshrl.u32 %v128, 7
    %v130 = vsub.s32 %v117, %v129
    %v131 = vrot.slane %v90, %v130
    %v132 = vsel %vm122, %v131, %v127
    %vm133 = vcmask 1041409
    %v134 = vsel %vm133, %v132, %v123
    %v140 = vlaneseq
    %v141 = vshrl.u32 %v140, 7
    %v142 = vsub.s32 %v112, %v141
    %v143 = vrot.slane %v103, %v142
    %v144 = vlaneseq
    %v145 = vshrl.u32 %v144, 7
    %v146 = vsub.s32 %v117, %v145
    %v147 = vrot.slane %v104, %v146
    %v148 = vsel %vm122, %v147, %v143
    %v149 = vlaneseq
    %v150 = vshrl.u32 %v149, 7
    %v151 = vsub.s32 %v112, %v150
    %v152 = vrot.slane %v105, %v151
    %v153 = vlaneseq
    %v154 = vshrl.u32 %v153, 7
    %v155 = vsub.s32 %v117, %v154
    %v156 = vrot.slane %v106, %v155
    %v157 = vsel %vm122, %v156, %v152
    %vm158 = vcmask 1043459
    %v159 = vsel %vm158, %v157, %v148
    %vm161 = vcmask 1041408
    %v162 = vsel %vm161, %v134, %v159
    %vm163 = vcmask 130048
    %v165 = vsel %vm163, %v162, 0
    %167 = vmatprep.subr.mxu0 0.0
    %168 = vmatpush1.msra.mxu0 %v72
    %169 = vmatprep.subr.mxu0 0.0
    %170 = vmatpush1.msra.mxu0 %v73
    %171 = vmatprep.subr.mxu0 0.0
    %172 = vmatpush1.msra.mxu0 0.0
    %173 = vmatprep.subr.mxu0 0.0
    %174 = vmatpush1.msra.mxu0 0.0
    %175 = vmatprep.subr.mxu0 0.0
    %176 = vmatpush1.msra.mxu0 0.0
    %177 = vmatprep.subr.mxu0 0.0
    %178 = vmatpush1.msra.mxu0 0.0
    %179 = vmatprep.subr.mxu0 0.0
    %180 = vmatpush1.msra.mxu0 0.0
    %181 = vmatprep.subr.mxu0 0.0
    %182 = vmatpush1.msra.mxu0 0.0
    %183 = vmatprep.subr.mxu0 0.0
    %184 = vmatpush1.msra.mxu0 0.0
    %185 = vmatprep.subr.mxu0 0.0
    %186 = vmatpush1.msra.mxu0 0.0
    %187 = vmatprep.subr.mxu0 0.0
    %188 = vmatpush1.msra.mxu0 0.0
    %189 = vmatprep.subr.mxu0 0.0
    %190 = vmatpush1.msra.mxu0 0.0
    %191 = vmatprep.subr.mxu0 0.0
    %192 = vmatpush1.msra.mxu0 0.0
    %193 = vmatprep.subr.mxu0 0.0
    %194 = vmatpush1.msra.mxu0 0.0
    %195 = vmatprep.subr.mxu0 0.0
    %196 = vmatpush1.msra.mxu0 0.0
    %197 = vmatprep.subr.mxu0 0.0
    %198 = vmatpush1.msra.mxu0 0.0
    %199 = vmatprep.subr.mxu0 0.0
    %200 = vmatpush1.msra.mxu0 0.0
    %201 = vmatprep.subr.mxu0 0.0
    %202 = vmatpush1.msra.mxu0 0.0
    %203 = vmatprep.subr.mxu0 0.0
    %204 = vmatpush1.msra.mxu0 0.0
    %205 = vmatprep.subr.mxu0 0.0
    %206 = vmatpush1.msra.mxu0 0.0
    %207 = vmatprep.subr.mxu0 0.0
    %208 = vmatpush1.msra.mxu0 0.0
    %209 = vmatprep.subr.mxu0 0.0
    %210 = vmatpush1.msra.mxu0 0.0
    %211 = vmatprep.subr.mxu0 0.0
    %212 = vmatpush1.msra.mxu0 0.0
    %213 = vmatprep.subr.mxu0 0.0
    %214 = vmatpush1.msra.mxu0 0.0
    %215 = vmatprep.subr.mxu0 0.0
    %216 = vmatpush1.msra.mxu0 0.0
    %217 = vmatprep.subr.mxu0 0.0
    %218 = vmatpush1.msra.mxu0 0.0
    %219 = vmatprep.subr.mxu0 0.0
    %220 = vmatpush1.msra.mxu0 0.0
    %221 = vmatprep.subr.mxu0 0.0
    %222 = vmatpush1.msra.mxu0 0.0
    %223 = vmatprep.subr.mxu0 0.0
    %224 = vmatpush1.msra.mxu0 0.0
    %225 = vmatprep.subr.mxu0 0.0
    %226 = vmatpush1.msra.mxu0 0.0
    %227 = vmatprep.subr.mxu0 0.0
    %228 = vmatpush1.msra.mxu0 0.0
    %229 = vmatprep.subr.mxu0 0.0
    %230 = vmatpush1.msra.mxu0 0.0
    %231 = vmatprep.mubr.f32.mxu0 0.0
    %232 = vmatmul.mubr.f32.gmra.mrb[0].mxu0 %v165
    %v233 = vpop.f32.mrb[0].mxu0
    %v234 = vadd.f32 0.0, %v233
    %v235 = vpop.f32.mrb[0].mxu0
    %236 = vdwg.mxu0
    %v237 = vmax.f32 %v234, 0.0
    %vm238 = vcmask 31744
    %v240 = vsel %vm238, %v237, 0
    %vm242 = vcmask 1043456
    %v244 = vsel %vm242, %v74, 0
    %246 = vmatprep.subr.mxu0 0.0
    %247 = vmatpush1.msra.mxu0 %v244
    %248 = vmatprep.subr.mxu0 0.0
    %249 = vmatpush1.msra.mxu0 0.0
    %250 = vmatprep.subr.mxu0 0.0
    %251 = vmatpush1.msra.mxu0 0.0
    %252 = vmatprep.subr.mxu0 0.0
    %253 = vmatpush1.msra.mxu0 0.0
    %254 = vmatprep.subr.mxu0 0.0
    %255 = vmatpush1.msra.mxu0 0.0
    %256 = vmatprep.subr.mxu0 0.0
    %257 = vmatpush1.msra.mxu0 0.0
    %258 = vmatprep.subr.mxu0 0.0
    %259 = vmatpush1.msra.mxu0 0.0
    %260 = vmatprep.subr.mxu0 0.0
    %261 = vmatpush1.msra.mxu0 0.0
    %262 = vmatprep.subr.mxu0 0.0
    %263 = vmatpush1.msra.mxu0 0.0
    %264 = vmatprep.subr.mxu0 0.0
    %265 = vmatpush1.msra.mxu0 0.0
    %266 = vmatprep.subr.mxu0 0.0
    %267 = vmatpush1.msra.mxu0 0.0
    %268 = vmatprep.subr.mxu0 0.0
    %269 = vmatpush1.msra.mxu0 0.0
    %270 = vmatprep.subr.mxu0 0.0
    %271 = vmatpush1.msra.mxu0 0.0
    %272 = vmatprep.subr.mxu0 0.0
    %273 = vmatpush1.msra.mxu0 0.0
    %274 = vmatprep.subr.mxu0 0.0
    %275 = vmatpush1.msra.mxu0 0.0
    %276 = vmatprep.subr.mxu0 0.0
    %277 = vmatpush1.msra.mxu0 0.0
    %278 = vmatprep.subr.mxu0 0.0
    %279 = vmatpush1.msra.mxu0 0.0
    %280 = vmatprep.subr.mxu0 0.0
    %281 = vmatpush1.msra.mxu0 0.0
    %282 = vmatprep.subr.mxu0 0.0
    %283 = vmatpush1.msra.mxu0 0.0
    %284 = vmatprep.subr.mxu0 0.0
    %285 = vmatpush1.msra.mxu0 0.0
    %286 = vmatprep.subr.mxu0 0.0
    %287 = vmatpush1.msra.mxu0 0.0
    %288 = vmatprep.subr.mxu0 0.0
    %289 = vmatpush1.msra.mxu0 0.0
    %290 = vmatprep.subr.mxu0 0.0
    %291 = vmatpush1.msra.mxu0 0.0
    %292 = vmatprep.subr.mxu0 0.0
    %293 = vmatpush1.msra.mxu0 0.0
    %294 = vmatprep.subr.mxu0 0.0
    %295 = vmatpush1.msra.mxu0 0.0
    %296 = vmatprep.subr.mxu0 0.0
    %297 = vmatpush1.msra.mxu0 0.0
    %298 = vmatprep.subr.mxu0 0.0
    %299 = vmatpush1.msra.mxu0 0.0
    %300 = vmatprep.subr.mxu0 0.0
    %301 = vmatpush1.msra.mxu0 0.0
    %302 = vmatprep.subr.mxu0 0.0
    %303 = vmatpush1.msra.mxu0 0.0
    %304 = vmatprep.subr.mxu0 0.0
    %305 = vmatpush1.msra.mxu0 0.0
    %306 = vmatprep.subr.mxu0 0.0
    %307 = vmatpush1.msra.mxu0 0.0
    %308 = vmatprep.subr.mxu0 0.0
    %309 = vmatpush1.msra.mxu0 0.0
    %310 = vmatprep.mubr.f32.mxu0 0.0
    %311 = vmatmul.mubr.f32.gmra.mrb[0].mxu0 %v240
    %v312 = vpop.f32.mrb[0].mxu0
    %v313 = vadd.f32 0.0, %v312
    %v314 = vpop.f32.mrb[0].mxu0
    %315 = vdwg.mxu0
    %v317 = vrot.slane %v313, 2
    %v319 = vadd.f32 %v313, %v317
    %v320 = vxor.u32 %v319, 2147483648
    %v321 = vmul.f32 %v320, 1.442695
    %v322 = vpow.pop %v321
    %v323 = vadd.f32 %v322, 1.0
    %v324 = vrcp.pop %v323
    %v325 = vmul.f32 1.0, %v324
    %v326 = vlaneseq
    %v327 = vshrl.u32 %v326, 7
    %v328 = vsub.s32 0, %v327
    %v329 = vrot.slane %v325, %v328
    %331 = vbcast.lane.b32.xlu0 %v329, 256
    %v332 = vpop.permute.xlu0 %331
    %s334 = sor.u32 256, 8
    %335 = vbcast.lane.b32.xlu0 %v329, %s334
    %v336 = vpop.permute.xlu0 %335
    %v337 = vlaneseq
    %v338 = vshrl.u32 %v337, 7
    %v339 = vsub.s32 1, %v338
    %v340 = vrot.slane %v325, %v339
    %342 = vbcast.lane.b32.xlu0 %v340, 256
    %v343 = vpop.permute.xlu0 %342
    %s345 = sor.u32 256, 8
    %346 = vbcast.lane.b32.xlu0 %v340, %s345
    %v347 = vpop.permute.xlu0 %346
    %v348 = vmul.f32 %v64, %v332
    %v349 = vmul.f32 %v65, %v332
    %v350 = vmul.f32 %v66, %v336
    %v351 = vmul.f32 %v67, %v336
    %v352 = vmul.f32 %v68, %v343
    %v353 = vmul.f32 %v69, %v343
    %v354 = vmul.f32 %v70, %v347
    %v355 = vmul.f32 %v71, %v347
    %v356 = vmax.f32 %v348, %v350
    %v357 = vrot.slane %v356, 4
    %v358 = vmax.f32 %v356, %v357
    %v359 = vrot.slane %v358, 2
    %v360 = vmax.f32 %v358, %v359
    %v361 = vrot.slane %v360, 1
    %v362 = vmax.f32 %v360, %v361
    %v363 = vmax.f32 %v349, %v351
    %v364 = vrot.slane %v363, 4
    %v365 = vmax.f32 %v363, %v364
    %v366 = vrot.slane %v365, 2
    %v367 = vmax.f32 %v365, %v366
    %v368 = vrot.slane %v367, 1
    %v369 = vmax.f32 %v367, %v368
    %v370 = vmax.f32 %v352, %v354
    %v371 = vrot.slane %v370, 4
    %v372 = vmax.f32 %v370, %v371
    %v373 = vrot.slane %v372, 2
    %v374 = vmax.f32 %v372, %v373
    %v375 = vrot.slane %v374, 1
    %v376 = vmax.f32 %v374, %v375
    %v377 = vmax.f32 %v353, %v355
    %v378 = vrot.slane %v377, 4
    %v379 = vmax.f32 %v377, %v378
    %v380 = vrot.slane %v379, 2
    %v381 = vmax.f32 %v379, %v380
    %v382 = vrot.slane %v381, 1
    %v383 = vmax.f32 %v381, %v382
    %v384 = vadd.f32 %v348, %v350
    %v385 = vrot.slane %v384, 4
    %v386 = vadd.f32 %v384, %v385
    %v387 = vrot.slane %v386, 2
    %v388 = vadd.f32 %v386, %v387
    %v389 = vrot.slane %v388, 1
    %v390 = vadd.f32 %v388, %v389
    %v391 = vadd.f32 %v349, %v351
    %v392 = vrot.slane %v391, 4
    %v393 = vadd.f32 %v391, %v392
    %v394 = vrot.slane %v393, 2
    %v395 = vadd.f32 %v393, %v394
    %v396 = vrot.slane %v395, 1
    %v397 = vadd.f32 %v395, %v396
    %v398 = vadd.f32 %v352, %v354
    %v399 = vrot.slane %v398, 4
    %v400 = vadd.f32 %v398, %v399
    %v401 = vrot.slane %v400, 2
    %v402 = vadd.f32 %v400, %v401
    %v403 = vrot.slane %v402, 1
    %v404 = vadd.f32 %v402, %v403
    %v405 = vadd.f32 %v353, %v355
    %v406 = vrot.slane %v405, 4
    %v407 = vadd.f32 %v405, %v406
    %v408 = vrot.slane %v407, 2
    %v409 = vadd.f32 %v407, %v408
    %v410 = vrot.slane %v409, 1
    %v411 = vadd.f32 %v409, %v410
    %v412 = vmul.f32 %v390, 0.0625
    %v413 = vmul.f32 %v397, 0.0625
    %v414 = vmul.f32 %v404, 0.0625
    %v415 = vmul.f32 %v411, 0.0625
    %v420 = vsel %vm133, %v376, %v362
    %v421 = vsel %vm133, %v383, %v369
    %424 = vrot.lane.b32.xlu0 %v420, 3
    %v425 = vpop.permute.xlu0 %424
    %426 = vrot.lane.b32.xlu0 %v421, 3
    %v427 = vpop.permute.xlu0 %426
    %vm428 = vcmp.lt.s32.totalorder %v112, 3
    %v429 = vsel %vm428, %v425, %v427
    %v430 = vsel %vm428, %v427, %v425
    %v435 = vsel %vm133, %v414, %v412
    %v436 = vsel %vm133, %v415, %v413
    %439 = vrot.lane.b32.xlu0 %v435, 3
    %v440 = vpop.permute.xlu0 %439
    %441 = vrot.lane.b32.xlu0 %v436, 3
    %v442 = vpop.permute.xlu0 %441
    %v443 = vsel %vm428, %v440, %v442
    %v444 = vsel %vm428, %v442, %v440
    %v445 = vlaneseq
    %v446 = vshrl.u32 %v445, 7
    %v447 = vsub.s32 0, %v446
    %v448 = vrot.slane %v75, %v447
    %v449 = vlaneseq
    %v450 = vshrl.u32 %v449, 7
    %v451 = vsub.s32 0, %v450
    %v452 = vrot.slane %v76, %v451
    %v453 = vmul.f32 %v430, %v448
    %v454 = vmul.f32 %v429, %v452
    %v455 = vmul.f32 %v444, %v448
    %v456 = vmul.f32 %v443, %v452
    %457 = vrot.lane.b32.xlu0 %v420, 2
    %v458 = vpop.permute.xlu0 %457
    %459 = vrot.lane.b32.xlu0 %v421, 2
    %v460 = vpop.permute.xlu0 %459
    %vm461 = vcmp.lt.s32.totalorder %v112, 2
    %v462 = vsel %vm461, %v458, %v460
    %v463 = vsel %vm461, %v460, %v458
    %464 = vrot.lane.b32.xlu0 %v435, 2
    %v465 = vpop.permute.xlu0 %464
    %466 = vrot.lane.b32.xlu0 %v436, 2
    %v467 = vpop.permute.xlu0 %466
    %v468 = vsel %vm461, %v465, %v467
    %v469 = vsel %vm461, %v467, %v465
    %v470 = vlaneseq
    %v471 = vshrl.u32 %v470, 7
    %v472 = vsub.s32 1, %v471
    %v473 = vrot.slane %v75, %v472
    %v474 = vlaneseq
    %v475 = vshrl.u32 %v474, 7
    %v476 = vsub.s32 1, %v475
    %v477 = vrot.slane %v76, %v476
    %v478 = vmul.f32 %v463, %v473
    %v479 = vmul.f32 %v462, %v477
    %v480 = vmul.f32 %v469, %v473
    %v481 = vmul.f32 %v468, %v477
    %482 = vrot.lane.b32.xlu0 %v420, 1
    %v483 = vpop.permute.xlu0 %482
    %484 = vrot.lane.b32.xlu0 %v421, 1
    %v485 = vpop.permute.xlu0 %484
    %vm486 = vcmp.lt.s32.totalorder %v112, 1
    %v487 = vsel %vm486, %v483, %v485
    %v488 = vsel %vm486, %v485, %v483
    %489 = vrot.lane.b32.xlu0 %v435, 1
    %v490 = vpop.permute.xlu0 %489
    %491 = vrot.lane.b32.xlu0 %v436, 1
    %v492 = vpop.permute.xlu0 %491
    %v493 = vsel %vm486, %v490, %v492
    %v494 = vsel %vm486, %v492, %v490
    %v495 = vlaneseq
    %v496 = vshrl.u32 %v495, 7
    %v497 = vsub.s32 2, %v496
    %v498 = vrot.slane %v75, %v497
    %v499 = vlaneseq
    %v500 = vshrl.u32 %v499, 7
    %v501 = vsub.s32 2, %v500
    %v502 = vrot.slane %v76, %v501
    %v503 = vmul.f32 %v488, %v498
    %v504 = vmul.f32 %v487, %v502
    %v505 = vmul.f32 %v494, %v498
    %v506 = vmul.f32 %v493, %v502
    %v507 = vlaneseq
    %v508 = vshrl.u32 %v507, 7
    %v509 = vsub.s32 3, %v508
    %v510 = vrot.slane %v75, %v509
    %v511 = vlaneseq
    %v512 = vshrl.u32 %v511, 7
    %v513 = vsub.s32 3, %v512
    %v514 = vrot.slane %v76, %v513
    %v515 = vmul.f32 %v362, %v510
    %v516 = vmul.f32 %v369, %v514
    %v517 = vmul.f32 %v376, %v510
    %v518 = vmul.f32 %v383, %v514
    %v519 = vmul.f32 %v412, %v510
    %v520 = vmul.f32 %v413, %v514
    %v521 = vmul.f32 %v414, %v510
    %v522 = vmul.f32 %v415, %v514
    %523 = vrot.lane.b32.xlu0 %v420, 127
    %v524 = vpop.permute.xlu0 %523
    %525 = vrot.lane.b32.xlu0 %v421, 127
    %v526 = vpop.permute.xlu0 %525
    %vm527 = vcmp.lt.s32.totalorder %v112, 127
    %v528 = vsel %vm527, %v524, %v526
    %v529 = vsel %vm527, %v526, %v524
    %530 = vrot.lane.b32.xlu0 %v435, 127
    %v531 = vpop.permute.xlu0 %530
    %532 = vrot.lane.b32.xlu0 %v436, 127
    %v533 = vpop.permute.xlu0 %532
    %v534 = vsel %vm527, %v531, %v533
    %v535 = vsel %vm527, %v533, %v531
    %v536 = vlaneseq
    %v537 = vshrl.u32 %v536, 7
    %v538 = vsub.s32 4, %v537
    %v539 = vrot.slane %v75, %v538
    %v540 = vlaneseq
    %v541 = vshrl.u32 %v540, 7
    %v542 = vsub.s32 4, %v541
    %v543 = vrot.slane %v76, %v542
    %v544 = vmul.f32 %v528, %v539
    %v545 = vmul.f32 %v529, %v543
    %v546 = vmul.f32 %v534, %v539
    %v547 = vmul.f32 %v535, %v543
    %548 = vrot.lane.b32.xlu0 %v420, 126
    %v549 = vpop.permute.xlu0 %548
    %550 = vrot.lane.b32.xlu0 %v421, 126
    %v551 = vpop.permute.xlu0 %550
    %vm552 = vcmp.lt.s32.totalorder %v112, 126
    %v553 = vsel %vm552, %v549, %v551
    %v554 = vsel %vm552, %v551, %v549
    %555 = vrot.lane.b32.xlu0 %v435, 126
    %v556 = vpop.permute.xlu0 %555
    %557 = vrot.lane.b32.xlu0 %v436, 126
    %v558 = vpop.permute.xlu0 %557
    %v559 = vsel %vm552, %v556, %v558
    %v560 = vsel %vm552, %v558, %v556
    %v561 = vlaneseq
    %v562 = vshrl.u32 %v561, 7
    %v563 = vsub.s32 5, %v562
    %v564 = vrot.slane %v75, %v563
    %v565 = vlaneseq
    %v566 = vshrl.u32 %v565, 7
    %v567 = vsub.s32 5, %v566
    %v568 = vrot.slane %v76, %v567
    %v569 = vmul.f32 %v553, %v564
    %v570 = vmul.f32 %v554, %v568
    %v571 = vmul.f32 %v559, %v564
    %v572 = vmul.f32 %v560, %v568
    %573 = vrot.lane.b32.xlu0 %v420, 125
    %v574 = vpop.permute.xlu0 %573
    %575 = vrot.lane.b32.xlu0 %v421, 125
    %v576 = vpop.permute.xlu0 %575
    %vm577 = vcmp.lt.s32.totalorder %v112, 125
    %v578 = vsel %vm577, %v574, %v576
    %v579 = vsel %vm577, %v576, %v574
    %580 = vrot.lane.b32.xlu0 %v435, 125
    %v581 = vpop.permute.xlu0 %580
    %582 = vrot.lane.b32.xlu0 %v436, 125
    %v583 = vpop.permute.xlu0 %582
    %v584 = vsel %vm577, %v581, %v583
    %v585 = vsel %vm577, %v583, %v581
    %v586 = vlaneseq
    %v587 = vshrl.u32 %v586, 7
    %v588 = vsub.s32 6, %v587
    %v589 = vrot.slane %v75, %v588
    %v590 = vlaneseq
    %v591 = vshrl.u32 %v590, 7
    %v592 = vsub.s32 6, %v591
    %v593 = vrot.slane %v76, %v592
    %v594 = vmul.f32 %v578, %v589
    %v595 = vmul.f32 %v579, %v593
    %v596 = vmul.f32 %v584, %v589
    %v597 = vmul.f32 %v585, %v593
    %s598 = sld [smem:[#allocation9]]
    %s599 = sld [smem:[#allocation9 + $0x31]]
    %v600 = vstv %s598
    %v601 = vmul.f32 %v600, %v453
    %v602 = vmul.f32 %v600, %v454
    %v603 = vadd.f32 %v601, 0.0
    %v604 = vadd.f32 %v602, 0.0
    %v605 = vstv %s599
    %v606 = vmul.f32 %v605, %v455
    %v607 = vmul.f32 %v605, %v456
    %v608 = vadd.f32 %v603, %v606
    %v609 = vadd.f32 %v604, %v607
    %s610 = sld [smem:[#allocation9 + $0x1]]
    %s611 = sld [smem:[#allocation9 + $0x32]]
    %v612 = vstv %s610
    %v613 = vmul.f32 %v612, %v478
    %v614 = vmul.f32 %v612, %v479
    %v615 = vadd.f32 %v608, %v613
    %v616 = vadd.f32 %v609, %v614
    %v617 = vstv %s611
    %v618 = vmul.f32 %v617, %v480
    %v619 = vmul.f32 %v617, %v481
    %v620 = vadd.f32 %v615, %v618
    %v621 = vadd.f32 %v616, %v619
    %s622 = sld [smem:[#allocation9 + $0x2]]
    %s623 = sld [smem:[#allocation9 + $0x33]]
    %v624 = vstv %s622
    %v625 = vmul.f32 %v624, %v503
    %v626 = vmul.f32 %v624, %v504
    %v627 = vadd.f32 %v620, %v625
    %v628 = vadd.f32 %v621, %v626
    %v629 = vstv %s623
    %v630 = vmul.f32 %v629, %v505
    %v631 = vmul.f32 %v629, %v506
    %v632 = vadd.f32 %v627, %v630
    %v633 = vadd.f32 %v628, %v631
    %s634 = sld [smem:[#allocation9 + $0x3]]
    %s635 = sld [smem:[#allocation9 + $0x34]]
    %v636 = vstv %s634
    %v637 = vmul.f32 %v636, %v515
    %v638 = vmul.f32 %v636, %v516
    %v639 = vmul.f32 %v636, %v517
    %v640 = vmul.f32 %v636, %v518
    %v645 = vrot.slane %v639, 7
    %v646 = vsel %vm133, %v645, %v637
    %v647 = vrot.slane %v640, 7
    %v648 = vsel %vm133, %v647, %v638
    %v651 = vadd.f32 %v632, %v646
    %v652 = vadd.f32 %v633, %v648
    %v653 = vstv %s635
    %v654 = vmul.f32 %v653, %v519
    %v655 = vmul.f32 %v653, %v520
    %v656 = vmul.f32 %v653, %v521
    %v657 = vmul.f32 %v653, %v522
    %v662 = vrot.slane %v656, 7
    %v663 = vsel %vm133, %v662, %v654
    %v664 = vrot.slane %v657, 7
    %v665 = vsel %vm133, %v664, %v655
    %v668 = vadd.f32 %v651, %v663
    %v669 = vadd.f32 %v652, %v665
    %s670 = sld [smem:[#allocation9 + $0x4]]
    %s671 = sld [smem:[#allocation9 + $0x35]]
    %v672 = vstv %s670
    %v673 = vmul.f32 %v672, %v544
    %v674 = vmul.f32 %v672, %v545
    %v675 = vadd.f32 %v668, %v673
    %v676 = vadd.f32 %v669, %v674
    %v677 = vstv %s671
    %v678 = vmul.f32 %v677, %v546
    %v679 = vmul.f32 %v677, %v547
    %v680 = vadd.f32 %v675, %v678
    %v681 = vadd.f32 %v676, %v679
    %s682 = sld [smem:[#allocation9 + $0x5]]
    %s683 = sld [smem:[#allocation9 + $0x36]]
    %v684 = vstv %s682
    %v685 = vmul.f32 %v684, %v569
    %v686 = vmul.f32 %v684, %v570
    %v687 = vadd.f32 %v680, %v685
    %v688 = vadd.f32 %v681, %v686
    %v689 = vstv %s683
    %v690 = vmul.f32 %v689, %v571
    %v691 = vmul.f32 %v689, %v572
    %v692 = vadd.f32 %v687, %v690
    %v693 = vadd.f32 %v688, %v691
    %s694 = sld [smem:[#allocation9 + $0x6]]
    %s695 = sld [smem:[#allocation9 + $0x37]]
    %v696 = vstv %s694
    %v697 = vmul.f32 %v696, %v594
    %v698 = vmul.f32 %v696, %v595
    %v699 = vadd.f32 %v692, %v697
    %v700 = vadd.f32 %v693, %v698
    %v701 = vstv %s695
    %v702 = vmul.f32 %v701, %v596
    %v703 = vmul.f32 %v701, %v597
    %v704 = vadd.f32 %v699, %v702
    %v705 = vadd.f32 %v700, %v703
    %706 = vrot.lane.b32.xlu0 %v704, 48
    %v707 = vpop.permute.xlu0 %706
    %708 = vrot.lane.b32.xlu0 %v705, 48
    %v709 = vpop.permute.xlu0 %708
    %vm710 = vcmp.lt.s32.totalorder %v112, 48
    %v711 = vsel %vm710, %v707, %v709
    %v712 = vsel %vm710, %v709, %v707
    %v713 = vlaneseq
    %v714 = vshrl.u32 %v713, 7
    %v715 = vsub.s32 7, %v714
    %v716 = vrot.slane %v75, %v715
    %v717 = vlaneseq
    %v718 = vshrl.u32 %v717, 7
    %v719 = vsub.s32 7, %v718
    %v720 = vrot.slane %v76, %v719
    %v721 = vmul.f32 %v712, %v716
    %v722 = vmul.f32 %v711, %v720
    %v723 = vadd.f32 %v721, 0.0
    %v724 = vadd.f32 %v722, 0.0
    %s725 = sld [smem:[#allocation9 + $0x7]]
    %s726 = sld [smem:[#allocation9 + $0x38]]
    %v727 = vstv %s725
    %v728 = vmul.f32 %v727, %v453
    %v729 = vmul.f32 %v727, %v454
    %v730 = vadd.f32 %v728, 0.0
    %v731 = vadd.f32 %v729, 0.0
    %v732 = vstv %s726
    %v733 = vmul.f32 %v732, %v455
    %v734 = vmul.f32 %v732, %v456
    %v735 = vadd.f32 %v730, %v733
    %v736 = vadd.f32 %v731, %v734
    %s737 = sld [smem:[#allocation9 + $0x8]]
    %s738 = sld [smem:[#allocation9 + $0x39]]
    %v739 = vstv %s737
    %v740 = vmul.f32 %v739, %v478
    %v741 = vmul.f32 %v739, %v479
    %v742 = vadd.f32 %v735, %v740
    %v743 = vadd.f32 %v736, %v741
    %v744 = vstv %s738
    %v745 = vmul.f32 %v744, %v480
    %v746 = vmul.f32 %v744, %v481
    %v747 = vadd.f32 %v742, %v745
    %v748 = vadd.f32 %v743, %v746
    %s749 = sld [smem:[#allocation9 + $0x9]]
    %s750 = sld [smem:[#allocation9 + $0x3a]]
    %v751 = vstv %s749
    %v752 = vmul.f32 %v751, %v503
    %v753 = vmul.f32 %v751, %v504
    %v754 = vadd.f32 %v747, %v752
    %v755 = vadd.f32 %v748, %v753
    %v756 = vstv %s750
    %v757 = vmul.f32 %v756, %v505
    %v758 = vmul.f32 %v756, %v506
    %v759 = vadd.f32 %v754, %v757
    %v760 = vadd.f32 %v755, %v758
    %s761 = sld [smem:[#allocation9 + $0xa]]
    %s762 = sld [smem:[#allocation9 + $0x3b]]
    %v763 = vstv %s761
    %v764 = vmul.f32 %v763, %v515
    %v765 = vmul.f32 %v763, %v516
    %v766 = vmul.f32 %v763, %v517
    %v767 = vmul.f32 %v763, %v518
    %v772 = vrot.slane %v766, 7
    %v773 = vsel %vm133, %v772, %v764
    %v774 = vrot.slane %v767, 7
    %v775 = vsel %vm133, %v774, %v765
    %v778 = vadd.f32 %v759, %v773
    %v779 = vadd.f32 %v760, %v775
    %v780 = vstv %s762
    %v781 = vmul.f32 %v780, %v519
    %v782 = vmul.f32 %v780, %v520
    %v783 = vmul.f32 %v780, %v521
    %v784 = vmul.f32 %v780, %v522
    %v789 = vrot.slane %v783, 7
    %v790 = vsel %vm133, %v789, %v781
    %v791 = vrot.slane %v784, 7
    %v792 = vsel %vm133, %v791, %v782
    %v795 = vadd.f32 %v778, %v790
    %v796 = vadd.f32 %v779, %v792
    %s797 = sld [smem:[#allocation9 + $0xb]]
    %s798 = sld [smem:[#allocation9 + $0x3c]]
    %v799 = vstv %s797
    %v800 = vmul.f32 %v799, %v544
    %v801 = vmul.f32 %v799, %v545
    %v802 = vadd.f32 %v795, %v800
    %v803 = vadd.f32 %v796, %v801
    %v804 = vstv %s798
    %v805 = vmul.f32 %v804, %v546
    %v806 = vmul.f32 %v804, %v547
    %v807 = vadd.f32 %v802, %v805
    %v808 = vadd.f32 %v803, %v806
    %s809 = sld [smem:[#allocation9 + $0xc]]
    %s810 = sld [smem:[#allocation9 + $0x3d]]
    %v811 = vstv %s809
    %v812 = vmul.f32 %v811, %v569
    %v813 = vmul.f32 %v811, %v570
    %v814 = vadd.f32 %v807, %v812
    %v815 = vadd.f32 %v808, %v813
    %v816 = vstv %s810
    %v817 = vmul.f32 %v816, %v571
    %v818 = vmul.f32 %v816, %v572
    %v819 = vadd.f32 %v814, %v817
    %v820 = vadd.f32 %v815, %v818
    %s821 = sld [smem:[#allocation9 + $0xd]]
    %s822 = sld [smem:[#allocation9 + $0x3e]]
    %v823 = vstv %s821
    %v824 = vmul.f32 %v823, %v594
    %v825 = vmul.f32 %v823, %v595
    %v826 = vadd.f32 %v819, %v824
    %v827 = vadd.f32 %v820, %v825
    %v828 = vstv %s822
    %v829 = vmul.f32 %v828, %v596
    %v830 = vmul.f32 %v828, %v597
    %v831 = vadd.f32 %v826, %v829
    %v832 = vadd.f32 %v827, %v830
    %833 = vrot.lane.b32.xlu0 %v831, 32
    %v834 = vpop.permute.xlu0 %833
    %835 = vrot.lane.b32.xlu0 %v832, 32
    %v836 = vpop.permute.xlu0 %835
    %vm837 = vcmp.lt.s32.totalorder %v112, 32
    %v838 = vsel %vm837, %v834, %v836
    %v839 = vsel %vm837, %v836, %v834
    %v840 = vlaneseq
    %v841 = vshrl.u32 %v840, 7
    %v842 = vsub.s32 0, %v841
    %v843 = vrot.slane %v77, %v842
    %v844 = vlaneseq
    %v845 = vshrl.u32 %v844, 7
    %v846 = vsub.s32 0, %v845
    %v847 = vrot.slane %v78, %v846
    %v848 = vmul.f32 %v839, %v843
    %v849 = vmul.f32 %v838, %v847
    %v850 = vadd.f32 %v723, %v848
    %v851 = vadd.f32 %v724, %v849
    %s852 = sld [smem:[#allocation9 + $0xe]]
    %s853 = sld [smem:[#allocation9 + $0x3f]]
    %v854 = vstv %s852
    %v855 = vmul.f32 %v854, %v453
    %v856 = vmul.f32 %v854, %v454
    %v857 = vadd.f32 %v855, 0.0
    %v858 = vadd.f32 %v856, 0.0
    %v859 = vstv %s853
    %v860 = vmul.f32 %v859, %v455
    %v861 = vmul.f32 %v859, %v456
    %v862 = vadd.f32 %v857, %v860
    %v863 = vadd.f32 %v858, %v861
    %s864 = sld [smem:[#allocation9 + $0xf]]
    %s865 = sld [smem:[#allocation9 + $0x40]]
    %v866 = vstv %s864
    %v867 = vmul.f32 %v866, %v478
    %v868 = vmul.f32 %v866, %v479
    %v869 = vadd.f32 %v862, %v867
    %v870 = vadd.f32 %v863, %v868
    %v871 = vstv %s865
    %v872 = vmul.f32 %v871, %v480
    %v873 = vmul.f32 %v871, %v481
    %v874 = vadd.f32 %v869, %v872
    %v875 = vadd.f32 %v870, %v873
    %s876 = sld [smem:[#allocation9 + $0x10]]
    %s877 = sld [smem:[#allocation9 + $0x41]]
    %v878 = vstv %s876
    %v879 = vmul.f32 %v878, %v503
    %v880 = vmul.f32 %v878, %v504
    %v881 = vadd.f32 %v874, %v879
    %v882 = vadd.f32 %v875, %v880
    %v883 = vstv %s877
    %v884 = vmul.f32 %v883, %v505
    %v885 = vmul.f32 %v883, %v506
    %v886 = vadd.f32 %v881, %v884
    %v887 = vadd.f32 %v882, %v885
    %s888 = sld [smem:[#allocation9 + $0x11]]
    %s889 = sld [smem:[#allocation9 + $0x42]]
    %v890 = vstv %s888
    %v891 = vmul.f32 %v890, %v515
    %v892 = vmul.f32 %v890, %v516
    %v893 = vmul.f32 %v890, %v517
    %v894 = vmul.f32 %v890, %v518
    %v899 = vrot.slane %v893, 7
    %v900 = vsel %vm133, %v899, %v891
    %v901 = vrot.slane %v894, 7
    %v902 = vsel %vm133, %v901, %v892
    %v905 = vadd.f32 %v886, %v900
    %v906 = vadd.f32 %v887, %v902
    %v907 = vstv %s889
    %v908 = vmul.f32 %v907, %v519
    %v909 = vmul.f32 %v907, %v520
    %v910 = vmul.f32 %v907, %v521
    %v911 = vmul.f32 %v907, %v522
    %v916 = vrot.slane %v910, 7
    %v917 = vsel %vm133, %v916, %v908
    %v918 = vrot.slane %v911, 7
    %v919 = vsel %vm133, %v918, %v909
    %v922 = vadd.f32 %v905, %v917
    %v923 = vadd.f32 %v906, %v919
    %s924 = sld [smem:[#allocation9 + $0x12]]
    %s925 = sld [smem:[#allocation9 + $0x43]]
    %v926 = vstv %s924
    %v927 = vmul.f32 %v926, %v544
    %v928 = vmul.f32 %v926, %v545
    %v929 = vadd.f32 %v922, %v927
    %v930 = vadd.f32 %v923, %v928
    %v931 = vstv %s925
    %v932 = vmul.f32 %v931, %v546
    %v933 = vmul.f32 %v931, %v547
    %v934 = vadd.f32 %v929, %v932
    %v935 = vadd.f32 %v930, %v933
    %s936 = sld [smem:[#allocation9 + $0x13]]
    %s937 = sld [smem:[#allocation9 + $0x44]]
    %v938 = vstv %s936
    %v939 = vmul.f32 %v938, %v569
    %v940 = vmul.f32 %v938, %v570
    %v941 = vadd.f32 %v934, %v939
    %v942 = vadd.f32 %v935, %v940
    %v943 = vstv %s937
    %v944 = vmul.f32 %v943, %v571
    %v945 = vmul.f32 %v943, %v572
    %v946 = vadd.f32 %v941, %v944
    %v947 = vadd.f32 %v942, %v945
    %s948 = sld [smem:[#allocation9 + $0x14]]
    %s949 = sld [smem:[#allocation9 + $0x45]]
    %v950 = vstv %s948
    %v951 = vmul.f32 %v950, %v594
    %v952 = vmul.f32 %v950, %v595
    %v953 = vadd.f32 %v946, %v951
    %v954 = vadd.f32 %v947, %v952
    %v955 = vstv %s949
    %v956 = vmul.f32 %v955, %v596
    %v957 = vmul.f32 %v955, %v597
    %v958 = vadd.f32 %v953, %v956
    %v959 = vadd.f32 %v954, %v957
    %960 = vrot.lane.b32.xlu0 %v958, 16
    %v961 = vpop.permute.xlu0 %960
    %962 = vrot.lane.b32.xlu0 %v959, 16
    %v963 = vpop.permute.xlu0 %962
    %vm964 = vcmp.lt.s32.totalorder %v112, 16
    %v965 = vsel %vm964, %v961, %v963
    %v966 = vsel %vm964, %v963, %v961
    %v967 = vlaneseq
    %v968 = vshrl.u32 %v967, 7
    %v969 = vsub.s32 1, %v968
    %v970 = vrot.slane %v77, %v969
    %v971 = vlaneseq
    %v972 = vshrl.u32 %v971, 7
    %v973 = vsub.s32 1, %v972
    %v974 = vrot.slane %v78, %v973
    %v975 = vmul.f32 %v966, %v970
    %v976 = vmul.f32 %v965, %v974
    %v977 = vadd.f32 %v850, %v975
    %v978 = vadd.f32 %v851, %v976
    %s979 = sld [smem:[#allocation9 + $0x15]]
    %s980 = sld [smem:[#allocation9 + $0x46]]
    %v981 = vstv %s979
    %v982 = vmul.f32 %v981, %v453
    %v983 = vmul.f32 %v981, %v454
    %v984 = vadd.f32 %v982, 0.0
    %v985 = vadd.f32 %v983, 0.0
    %v986 = vstv %s980
    %v987 = vmul.f32 %v986, %v455
    %v988 = vmul.f32 %v986, %v456
    %v989 = vadd.f32 %v984, %v987
    %v990 = vadd.f32 %v985, %v988
    %s991 = sld [smem:[#allocation9 + $0x16]]
    %s992 = sld [smem:[#allocation9 + $0x47]]
    %v993 = vstv %s991
    %v994 = vmul.f32 %v993, %v478
    %v995 = vmul.f32 %v993, %v479
    %v996 = vadd.f32 %v989, %v994
    %v997 = vadd.f32 %v990, %v995
    %v998 = vstv %s992
    %v999 = vmul.f32 %v998, %v480
    %v1000 = vmul.f32 %v998, %v481
    %v1001 = vadd.f32 %v996, %v999
    %v1002 = vadd.f32 %v997, %v1000
    %s1003 = sld [smem:[#allocation9 + $0x17]]
    %s1004 = sld [smem:[#allocation9 + $0x48]]
    %v1005 = vstv %s1003
    %v1006 = vmul.f32 %v1005, %v503
    %v1007 = vmul.f32 %v1005, %v504
    %v1008 = vadd.f32 %v1001, %v1006
    %v1009 = vadd.f32 %v1002, %v1007
    %v1010 = vstv %s1004
    %v1011 = vmul.f32 %v1010, %v505
    %v1012 = vmul.f32 %v1010, %v506
    %v1013 = vadd.f32 %v1008, %v1011
    %v1014 = vadd.f32 %v1009, %v1012
    %s1015 = sld [smem:[#allocation9 + $0x18]]
    %s1016 = sld [smem:[#allocation9 + $0x49]]
    %v1017 = vstv %s1015
    %v1018 = vmul.f32 %v1017, %v515
    %v1019 = vmul.f32 %v1017, %v516
    %v1020 = vmul.f32 %v1017, %v517
    %v1021 = vmul.f32 %v1017, %v518
    %v1026 = vrot.slane %v1020, 7
    %v1027 = vsel %vm133, %v1026, %v1018
    %v1028 = vrot.slane %v1021, 7
    %v1029 = vsel %vm133, %v1028, %v1019
    %v1032 = vadd.f32 %v1013, %v1027
    %v1033 = vadd.f32 %v1014, %v1029
    %v1034 = vstv %s1016
    %v1035 = vmul.f32 %v1034, %v519
    %v1036 = vmul.f32 %v1034, %v520
    %v1037 = vmul.f32 %v1034, %v521
    %v1038 = vmul.f32 %v1034, %v522
    %v1043 = vrot.slane %v1037, 7
    %v1044 = vsel %vm133, %v1043, %v1035
    %v1045 = vrot.slane %v1038, 7
    %v1046 = vsel %vm133, %v1045, %v1036
    %v1049 = vadd.f32 %v1032, %v1044
    %v1050 = vadd.f32 %v1033, %v1046
    %s1051 = sld [smem:[#allocation9 + $0x19]]
    %s1052 = sld [smem:[#allocation9 + $0x4a]]
    %v1053 = vstv %s1051
    %v1054 = vmul.f32 %v1053, %v544
    %v1055 = vmul.f32 %v1053, %v545
    %v1056 = vadd.f32 %v1049, %v1054
    %v1057 = vadd.f32 %v1050, %v1055
    %v1058 = vstv %s1052
    %v1059 = vmul.f32 %v1058, %v546
    %v1060 = vmul.f32 %v1058, %v547
    %v1061 = vadd.f32 %v1056, %v1059
    %v1062 = vadd.f32 %v1057, %v1060
    %s1063 = sld [smem:[#allocation9 + $0x1a]]
    %s1064 = sld [smem:[#allocation9 + $0x4b]]
    %v1065 = vstv %s1063
    %v1066 = vmul.f32 %v1065, %v569
    %v1067 = vmul.f32 %v1065, %v570
    %v1068 = vadd.f32 %v1061, %v1066
    %v1069 = vadd.f32 %v1062, %v1067
    %v1070 = vstv %s1064
    %v1071 = vmul.f32 %v1070, %v571
    %v1072 = vmul.f32 %v1070, %v572
    %v1073 = vadd.f32 %v1068, %v1071
    %v1074 = vadd.f32 %v1069, %v1072
    %s1075 = sld [smem:[#allocation9 + $0x1b]]
    %s1076 = sld [smem:[#allocation9 + $0x4c]]
    %v1077 = vstv %s1075
    %v1078 = vmul.f32 %v1077, %v594
    %v1079 = vmul.f32 %v1077, %v595
    %v1080 = vadd.f32 %v1073, %v1078
    %v1081 = vadd.f32 %v1074, %v1079
    %v1082 = vstv %s1076
    %v1083 = vmul.f32 %v1082, %v596
    %v1084 = vmul.f32 %v1082, %v597
    %v1085 = vadd.f32 %v1080, %v1083
    %v1086 = vadd.f32 %v1081, %v1084
    %v1087 = vlaneseq
    %v1088 = vshrl.u32 %v1087, 7
    %v1089 = vsub.s32 2, %v1088
    %v1090 = vrot.slane %v77, %v1089
    %v1091 = vlaneseq
    %v1092 = vshrl.u32 %v1091, 7
    %v1093 = vsub.s32 2, %v1092
    %v1094 = vrot.slane %v78, %v1093
    %v1095 = vmul.f32 %v1085, %v1090
    %v1096 = vmul.f32 %v1086, %v1094
    %v1097 = vadd.f32 %v977, %v1095
    %v1098 = vadd.f32 %v978, %v1096
    %s1099 = sld [smem:[#allocation9 + $0x1c]]
    %s1100 = sld [smem:[#allocation9 + $0x4d]]
    %v1101 = vstv %s1099
    %v1102 = vmul.f32 %v1101, %v453
    %v1103 = vmul.f32 %v1101, %v454
    %v1104 = vadd.f32 %v1102, 0.0
    %v1105 = vadd.f32 %v1103, 0.0
    %v1106 = vstv %s1100
    %v1107 = vmul.f32 %v1106, %v455
    %v1108 = vmul.f32 %v1106, %v456
    %v1109 = vadd.f32 %v1104, %v1107
    %v1110 = vadd.f32 %v1105, %v1108
    %s1111 = sld [smem:[#allocation9 + $0x1d]]
    %s1112 = sld [smem:[#allocation9 + $0x4e]]
    %v1113 = vstv %s1111
    %v1114 = vmul.f32 %v1113, %v478
    %v1115 = vmul.f32 %v1113, %v479
    %v1116 = vadd.f32 %v1109, %v1114
    %v1117 = vadd.f32 %v1110, %v1115
    %v1118 = vstv %s1112
    %v1119 = vmul.f32 %v1118, %v480
    %v1120 = vmul.f32 %v1118, %v481
    %v1121 = vadd.f32 %v1116, %v1119
    %v1122 = vadd.f32 %v1117, %v1120
    %s1123 = sld [smem:[#allocation9 + $0x1e]]
    %s1124 = sld [smem:[#allocation9 + $0x4f]]
    %v1125 = vstv %s1123
    %v1126 = vmul.f32 %v1125, %v503
    %v1127 = vmul.f32 %v1125, %v504
    %v1128 = vadd.f32 %v1121, %v1126
    %v1129 = vadd.f32 %v1122, %v1127
    %v1130 = vstv %s1124
    %v1131 = vmul.f32 %v1130, %v505
    %v1132 = vmul.f32 %v1130, %v506
    %v1133 = vadd.f32 %v1128, %v1131
    %v1134 = vadd.f32 %v1129, %v1132
    %s1135 = sld [smem:[#allocation9 + $0x1f]]
    %s1136 = sld [smem:[#allocation9 + $0x50]]
    %v1137 = vstv %s1135
    %v1138 = vmul.f32 %v1137, %v515
    %v1139 = vmul.f32 %v1137, %v516
    %v1140 = vmul.f32 %v1137, %v517
    %v1141 = vmul.f32 %v1137, %v518
    %v1146 = vrot.slane %v1140, 7
    %v1147 = vsel %vm133, %v1146, %v1138
    %v1148 = vrot.slane %v1141, 7
    %v1149 = vsel %vm133, %v1148, %v1139
    %v1152 = vadd.f32 %v1133, %v1147
    %v1153 = vadd.f32 %v1134, %v1149
    %v1154 = vstv %s1136
    %v1155 = vmul.f32 %v1154, %v519
    %v1156 = vmul.f32 %v1154, %v520
    %v1157 = vmul.f32 %v1154, %v521
    %v1158 = vmul.f32 %v1154, %v522
    %v1163 = vrot.slane %v1157, 7
    %v1164 = vsel %vm133, %v1163, %v1155
    %v1165 = vrot.slane %v1158, 7
    %v1166 = vsel %vm133, %v1165, %v1156
    %v1169 = vadd.f32 %v1152, %v1164
    %v1170 = vadd.f32 %v1153, %v1166
    %s1171 = sld [smem:[#allocation9 + $0x20]]
    %s1172 = sld [smem:[#allocation9 + $0x51]]
    %v1173 = vstv %s1171
    %v1174 = vmul.f32 %v1173, %v544
    %v1175 = vmul.f32 %v1173, %v545
    %v1176 = vadd.f32 %v1169, %v1174
    %v1177 = vadd.f32 %v1170, %v1175
    %v1178 = vstv %s1172
    %v1179 = vmul.f32 %v1178, %v546
    %v1180 = vmul.f32 %v1178, %v547
    %v1181 = vadd.f32 %v1176, %v1179
    %v1182 = vadd.f32 %v1177, %v1180
    %s1183 = sld [smem:[#allocation9 + $0x21]]
    %s1184 = sld [smem:[#allocation9 + $0x52]]
    %v1185 = vstv %s1183
    %v1186 = vmul.f32 %v1185, %v569
    %v1187 = vmul.f32 %v1185, %v570
    %v1188 = vadd.f32 %v1181, %v1186
    %v1189 = vadd.f32 %v1182, %v1187
    %v1190 = vstv %s1184
    %v1191 = vmul.f32 %v1190, %v571
    %v1192 = vmul.f32 %v1190, %v572
    %v1193 = vadd.f32 %v1188, %v1191
    %v1194 = vadd.f32 %v1189, %v1192
    %s1195 = sld [smem:[#allocation9 + $0x22]]
    %s1196 = sld [smem:[#allocation9 + $0x53]]
    %v1197 = vstv %s1195
    %v1198 = vmul.f32 %v1197, %v594
    %v1199 = vmul.f32 %v1197, %v595
    %v1200 = vadd.f32 %v1193, %v1198
    %v1201 = vadd.f32 %v1194, %v1199
    %v1202 = vstv %s1196
    %v1203 = vmul.f32 %v1202, %v596
    %v1204 = vmul.f32 %v1202, %v597
    %v1205 = vadd.f32 %v1200, %v1203
    %v1206 = vadd.f32 %v1201, %v1204
    %1207 = vrot.lane.b32.xlu0 %v1205, 112
    %v1208 = vpop.permute.xlu0 %1207
    %1209 = vrot.lane.b32.xlu0 %v1206, 112
    %v1210 = vpop.permute.xlu0 %1209
    %vm1211 = vcmp.lt.s32.totalorder %v112, 112
    %v1212 = vsel %vm1211, %v1208, %v1210
    %v1213 = vsel %vm1211, %v1210, %v1208
    %v1214 = vlaneseq
    %v1215 = vshrl.u32 %v1214, 7
    %v1216 = vsub.s32 3, %v1215
    %v1217 = vrot.slane %v77, %v1216
    %v1218 = vlaneseq
    %v1219 = vshrl.u32 %v1218, 7
    %v1220 = vsub.s32 3, %v1219
    %v1221 = vrot.slane %v78, %v1220
    %v1222 = vmul.f32 %v1212, %v1217
    %v1223 = vmul.f32 %v1213, %v1221
    %v1224 = vadd.f32 %v1097, %v1222
    %v1225 = vadd.f32 %v1098, %v1223
    %s1226 = sld [smem:[#allocation9 + $0x23]]
    %s1227 = sld [smem:[#allocation9 + $0x54]]
    %v1228 = vstv %s1226
    %v1229 = vmul.f32 %v1228, %v453
    %v1230 = vmul.f32 %v1228, %v454
    %v1231 = vadd.f32 %v1229, 0.0
    %v1232 = vadd.f32 %v1230, 0.0
    %v1233 = vstv %s1227
    %v1234 = vmul.f32 %v1233, %v455
    %v1235 = vmul.f32 %v1233, %v456
    %v1236 = vadd.f32 %v1231, %v1234
    %v1237 = vadd.f32 %v1232, %v1235
    %s1238 = sld [smem:[#allocation9 + $0x24]]
    %s1239 = sld [smem:[#allocation9 + $0x55]]
    %v1240 = vstv %s1238
    %v1241 = vmul.f32 %v1240, %v478
    %v1242 = vmul.f32 %v1240, %v479
    %v1243 = vadd.f32 %v1236, %v1241
    %v1244 = vadd.f32 %v1237, %v1242
    %v1245 = vstv %s1239
    %v1246 = vmul.f32 %v1245, %v480
    %v1247 = vmul.f32 %v1245, %v481
    %v1248 = vadd.f32 %v1243, %v1246
    %v1249 = vadd.f32 %v1244, %v1247
    %s1250 = sld [smem:[#allocation9 + $0x25]]
    %s1251 = sld [smem:[#allocation9 + $0x56]]
    %v1252 = vstv %s1250
    %v1253 = vmul.f32 %v1252, %v503
    %v1254 = vmul.f32 %v1252, %v504
    %v1255 = vadd.f32 %v1248, %v1253
    %v1256 = vadd.f32 %v1249, %v1254
    %v1257 = vstv %s1251
    %v1258 = vmul.f32 %v1257, %v505
    %v1259 = vmul.f32 %v1257, %v506
    %v1260 = vadd.f32 %v1255, %v1258
    %v1261 = vadd.f32 %v1256, %v1259
    %s1262 = sld [smem:[#allocation9 + $0x26]]
    %s1263 = sld [smem:[#allocation9 + $0x57]]
    %v1264 = vstv %s1262
    %v1265 = vmul.f32 %v1264, %v515
    %v1266 = vmul.f32 %v1264, %v516
    %v1267 = vmul.f32 %v1264, %v517
    %v1268 = vmul.f32 %v1264, %v518
    %v1273 = vrot.slane %v1267, 7
    %v1274 = vsel %vm133, %v1273, %v1265
    %v1275 = vrot.slane %v1268, 7
    %v1276 = vsel %vm133, %v1275, %v1266
    %v1279 = vadd.f32 %v1260, %v1274
    %v1280 = vadd.f32 %v1261, %v1276
    %v1281 = vstv %s1263
    %v1282 = vmul.f32 %v1281, %v519
    %v1283 = vmul.f32 %v1281, %v520
    %v1284 = vmul.f32 %v1281, %v521
    %v1285 = vmul.f32 %v1281, %v522
    %v1290 = vrot.slane %v1284, 7
    %v1291 = vsel %vm133, %v1290, %v1282
    %v1292 = vrot.slane %v1285, 7
    %v1293 = vsel %vm133, %v1292, %v1283
    %v1296 = vadd.f32 %v1279, %v1291
    %v1297 = vadd.f32 %v1280, %v1293
    %s1298 = sld [smem:[#allocation9 + $0x27]]
    %s1299 = sld [smem:[#allocation9 + $0x58]]
    %v1300 = vstv %s1298
    %v1301 = vmul.f32 %v1300, %v544
    %v1302 = vmul.f32 %v1300, %v545
    %v1303 = vadd.f32 %v1296, %v1301
    %v1304 = vadd.f32 %v1297, %v1302
    %v1305 = vstv %s1299
    %v1306 = vmul.f32 %v1305, %v546
    %v1307 = vmul.f32 %v1305, %v547
    %v1308 = vadd.f32 %v1303, %v1306
    %v1309 = vadd.f32 %v1304, %v1307
    %s1310 = sld [smem:[#allocation9 + $0x28]]
    %s1311 = sld [smem:[#allocation9 + $0x59]]
    %v1312 = vstv %s1310
    %v1313 = vmul.f32 %v1312, %v569
    %v1314 = vmul.f32 %v1312, %v570
    %v1315 = vadd.f32 %v1308, %v1313
    %v1316 = vadd.f32 %v1309, %v1314
    %v1317 = vstv %s1311
    %v1318 = vmul.f32 %v1317, %v571
    %v1319 = vmul.f32 %v1317, %v572
    %v1320 = vadd.f32 %v1315, %v1318
    %v1321 = vadd.f32 %v1316, %v1319
    %s1322 = sld [smem:[#allocation9 + $0x29]]
    %s1323 = sld [smem:[#allocation9 + $0x5a]]
    %v1324 = vstv %s1322
    %v1325 = vmul.f32 %v1324, %v594
    %v1326 = vmul.f32 %v1324, %v595
    %v1327 = vadd.f32 %v1320, %v1325
    %v1328 = vadd.f32 %v1321, %v1326
    %v1329 = vstv %s1323
    %v1330 = vmul.f32 %v1329, %v596
    %v1331 = vmul.f32 %v1329, %v597
    %v1332 = vadd.f32 %v1327, %v1330
    %v1333 = vadd.f32 %v1328, %v1331
    %1334 = vrot.lane.b32.xlu0 %v1332, 96
    %v1335 = vpop.permute.xlu0 %1334
    %1336 = vrot.lane.b32.xlu0 %v1333, 96
    %v1337 = vpop.permute.xlu0 %1336
    %vm1338 = vcmp.lt.s32.totalorder %v112, 96
    %v1339 = vsel %vm1338, %v1335, %v1337
    %v1340 = vsel %vm1338, %v1337, %v1335
    %v1341 = vlaneseq
    %v1342 = vshrl.u32 %v1341, 7
    %v1343 = vsub.s32 4, %v1342
    %v1344 = vrot.slane %v77, %v1343
    %v1345 = vlaneseq
    %v1346 = vshrl.u32 %v1345, 7
    %v1347 = vsub.s32 4, %v1346
    %v1348 = vrot.slane %v78, %v1347
    %v1349 = vmul.f32 %v1339, %v1344
    %v1350 = vmul.f32 %v1340, %v1348
    %v1351 = vadd.f32 %v1224, %v1349
    %v1352 = vadd.f32 %v1225, %v1350
    %s1353 = sld [smem:[#allocation9 + $0x2a]]
    %s1354 = sld [smem:[#allocation9 + $0x5b]]
    %v1355 = vstv %s1353
    %v1356 = vmul.f32 %v1355, %v453
    %v1357 = vmul.f32 %v1355, %v454
    %v1358 = vadd.f32 %v1356, 0.0
    %v1359 = vadd.f32 %v1357, 0.0
    %v1360 = vstv %s1354
    %v1361 = vmul.f32 %v1360, %v455
    %v1362 = vmul.f32 %v1360, %v456
    %v1363 = vadd.f32 %v1358, %v1361
    %v1364 = vadd.f32 %v1359, %v1362
    %s1365 = sld [smem:[#allocation9 + $0x2b]]
    %s1366 = sld [smem:[#allocation9 + $0x5c]]
    %v1367 = vstv %s1365
    %v1368 = vmul.f32 %v1367, %v478
    %v1369 = vmul.f32 %v1367, %v479
    %v1370 = vadd.f32 %v1363, %v1368
    %v1371 = vadd.f32 %v1364, %v1369
    %v1372 = vstv %s1366
    %v1373 = vmul.f32 %v1372, %v480
    %v1374 = vmul.f32 %v1372, %v481
    %v1375 = vadd.f32 %v1370, %v1373
    %v1376 = vadd.f32 %v1371, %v1374
    %s1377 = sld [smem:[#allocation9 + $0x2c]]
    %s1378 = sld [smem:[#allocation9 + $0x5d]]
    %v1379 = vstv %s1377
    %v1380 = vmul.f32 %v1379, %v503
    %v1381 = vmul.f32 %v1379, %v504
    %v1382 = vadd.f32 %v1375, %v1380
    %v1383 = vadd.f32 %v1376, %v1381
    %v1384 = vstv %s1378
    %v1385 = vmul.f32 %v1384, %v505
    %v1386 = vmul.f32 %v1384, %v506
    %v1387 = vadd.f32 %v1382, %v1385
    %v1388 = vadd.f32 %v1383, %v1386
    %s1389 = sld [smem:[#allocation9 + $0x2d]]
    %s1390 = sld [smem:[#allocation9 + $0x5e]]
    %v1391 = vstv %s1389
    %v1392 = vmul.f32 %v1391, %v515
    %v1393 = vmul.f32 %v1391, %v516
    %v1394 = vmul.f32 %v1391, %v517
    %v1395 = vmul.f32 %v1391, %v518
    %v1400 = vrot.slane %v1394, 7
    %v1401 = vsel %vm133, %v1400, %v1392
    %v1402 = vrot.slane %v1395, 7
    %v1403 = vsel %vm133, %v1402, %v1393
    %v1406 = vadd.f32 %v1387, %v1401
    %v1407 = vadd.f32 %v1388, %v1403
    %v1408 = vstv %s1390
    %v1409 = vmul.f32 %v1408, %v519
    %v1410 = vmul.f32 %v1408, %v520
    %v1411 = vmul.f32 %v1408, %v521
    %v1412 = vmul.f32 %v1408, %v522
    %v1417 = vrot.slane %v1411, 7
    %v1418 = vsel %vm133, %v1417, %v1409
    %v1419 = vrot.slane %v1412, 7
    %v1420 = vsel %vm133, %v1419, %v1410
    %v1423 = vadd.f32 %v1406, %v1418
    %v1424 = vadd.f32 %v1407, %v1420
    %s1425 = sld [smem:[#allocation9 + $0x2e]]
    %s1426 = sld [smem:[#allocation9 + $0x5f]]
    %v1427 = vstv %s1425
    %v1428 = vmul.f32 %v1427, %v544
    %v1429 = vmul.f32 %v1427, %v545
    %v1430 = vadd.f32 %v1423, %v1428
    %v1431 = vadd.f32 %v1424, %v1429
    %v1432 = vstv %s1426
    %v1433 = vmul.f32 %v1432, %v546
    %v1434 = vmul.f32 %v1432, %v547
    %v1435 = vadd.f32 %v1430, %v1433
    %v1436 = vadd.f32 %v1431, %v1434
    %s1437 = sld [smem:[#allocation9 + $0x2f]]
    %s1438 = sld [smem:[#allocation9 + $0x60]]
    %v1439 = vstv %s1437
    %v1440 = vmul.f32 %v1439, %v569
    %v1441 = vmul.f32 %v1439, %v570
    %v1442 = vadd.f32 %v1435, %v1440
    %v1443 = vadd.f32 %v1436, %v1441
    %v1444 = vstv %s1438
    %v1445 = vmul.f32 %v1444, %v571
    %v1446 = vmul.f32 %v1444, %v572
    %v1447 = vadd.f32 %v1442, %v1445
    %v1448 = vadd.f32 %v1443, %v1446
    %s1449 = sld [smem:[#allocation9 + $0x30]]
    %s1450 = sld [smem:[#allocation9 + $0x61]]
    %v1451 = vstv %s1449
    %v1452 = vmul.f32 %v1451, %v594
    %v1453 = vmul.f32 %v1451, %v595
    %v1454 = vadd.f32 %v1447, %v1452
    %v1455 = vadd.f32 %v1448, %v1453
    %v1456 = vstv %s1450
    %v1457 = vmul.f32 %v1456, %v596
    %v1458 = vmul.f32 %v1456, %v597
    %v1459 = vadd.f32 %v1454, %v1457
    %v1460 = vadd.f32 %v1455, %v1458
    %1461 = vrot.lane.b32.xlu0 %v1459, 80
    %v1462 = vpop.permute.xlu0 %1461
    %1463 = vrot.lane.b32.xlu0 %v1460, 80
    %v1464 = vpop.permute.xlu0 %1463
    %vm1465 = vcmp.lt.s32.totalorder %v112, 80
    %v1466 = vsel %vm1465, %v1462, %v1464
    %v1467 = vsel %vm1465, %v1464, %v1462
    %v1468 = vlaneseq
    %v1469 = vshrl.u32 %v1468, 7
    %v1470 = vsub.s32 5, %v1469
    %v1471 = vrot.slane %v77, %v1470
    %v1472 = vlaneseq
    %v1473 = vshrl.u32 %v1472, 7
    %v1474 = vsub.s32 5, %v1473
    %v1475 = vrot.slane %v78, %v1474
    %v1476 = vmul.f32 %v1466, %v1471
    %v1477 = vmul.f32 %v1467, %v1475
    %v1478 = vadd.f32 %v1351, %v1476
    %v1479 = vadd.f32 %v1352, %v1477
    %s1480 = sld [smem:[#allocation2]]
    %v1481 = vstv %s1480
    %v1482 = vadd.f32 %v1478, %v1481
    %v1483 = vadd.f32 %v1479, %v1481
    %v1484 = vxor.u32 %v1482, 2147483648
    %v1485 = vxor.u32 %v1483, 2147483648
    %v1486 = vmul.f32 %v1484, 1.442695
    %v1487 = vpow.pop %v1486
    %v1488 = vmul.f32 %v1485, 1.442695
    %v1489 = vpow.pop %v1488
    %v1490 = vadd.f32 %v1487, 1.0
    %v1491 = vadd.f32 %v1489, 1.0
    %v1492 = vrcp.pop %v1490
    %v1493 = vmul.f32 1.0, %v1492
    %v1494 = vrcp.pop %v1491
    %v1495 = vmul.f32 1.0, %v1494
    %v1498 = vcombine.low %v1493, %v1495
    %v1500 = vunpack.c.l.s4 1966171168
    %v1501 = vunpack.c.0.s8 %v1500
    %v1502 = vlaneseq
    %v1503 = vshrl.u32 %v1502, 7
    %v1504 = vsub.s32 %v1501, %v1503
    %v1505 = vrot.slane %v1498, %v1504
    %v1506 = vcombine.high %v1505, %v1505
    %v1508 = vunpack.c.l.s4 1966171168
    %v1509 = vunpack.c.0.s8 %v1508
    %v1510 = vlaneseq
    %v1511 = vshrl.u32 %v1510, 7
    %v1512 = vsub.s32 %v1509, %v1511
    %v1513 = vrot.slane %v1505, %v1512
    %v1515 = vunpack.c.l.s4 1966171168
    %v1516 = vunpack.c.0.s8 %v1515
    %v1517 = vlaneseq
    %v1518 = vshrl.u32 %v1517, 7
    %v1519 = vsub.s32 %v1516, %v1518
    %v1520 = vrot.slane %v1506, %v1519
    %v1521 = vlaneseq
    %v1522 = vshrl.u32 %v1521, 7
    %v1523 = vsub.s32 0, %v1522
    %v1524 = vrot.slane %v1513, %v1523
    %v1525 = vlaneseq
    %v1526 = vshrl.u32 %v1525, 7
    %v1527 = vsub.s32 1, %v1526
    %v1528 = vrot.slane %v1513, %v1527
    %v1529 = vlaneseq
    %v1530 = vshrl.u32 %v1529, 7
    %v1531 = vsub.s32 0, %v1530
    %v1532 = vrot.slane %v1520, %v1531
    %v1533 = vlaneseq
    %v1534 = vshrl.u32 %v1533, 7
    %v1535 = vsub.s32 1, %v1534
    %v1536 = vrot.slane %v1520, %v1535
    %v1541 = vmul.f32 %v332, %v1524
    %v1542 = vmul.f32 %v332, %v1528
    %v1543 = vmul.f32 %v336, %v1524
    %v1544 = vmul.f32 %v336, %v1528
    %v1545 = vmul.f32 %v343, %v1532
    %v1546 = vmul.f32 %v343, %v1536
    %v1547 = vmul.f32 %v347, %v1532
    %v1548 = vmul.f32 %v347, %v1536
    %v1549 = vadd.f32 %v1541, 1.0
    %v1550 = vadd.f32 %v1542, 1.0
    %v1551 = vadd.f32 %v1543, 1.0
    %v1552 = vadd.f32 %v1544, 1.0
    %v1553 = vadd.f32 %v1545, 1.0
    %v1554 = vadd.f32 %v1546, 1.0
    %v1555 = vadd.f32 %v1547, 1.0
    %v1556 = vadd.f32 %v1548, 1.0
    %v1557 = vmul.f32 %v64, %v1549
    %v1558 = vmul.f32 %v65, %v1550
    %v1559 = vmul.f32 %v66, %v1551
    %v1560 = vmul.f32 %v67, %v1552
    %v1561 = vmul.f32 %v68, %v1553
    %v1562 = vmul.f32 %v69, %v1554
    %v1563 = vmul.f32 %v70, %v1555
    %v1564 = vmul.f32 %v71, %v1556
    %1565 = vst [vmem:[#allocation10] sm:$0xff] %v1557
    %1566 = vst [vmem:[#allocation10 + $0x8] sm:$0xff] %v1558
    %1567 = vst [vmem:[#allocation10 + $0x10] sm:$0xff] %v1559
    %1568 = vst [vmem:[#allocation10 + $0x18] sm:$0xff] %v1560
    %1569 = vst [vmem:[#allocation10 + $0x20] sm:$0xff] %v1561
    %1570 = vst [vmem:[#allocation10 + $0x28] sm:$0xff] %v1562
    %1571 = vst [vmem:[#allocation10 + $0x30] sm:$0xff] %v1563
    %1572 = vst [vmem:[#allocation10 + $0x38] sm:$0xff] %v1564
    // Predicated region
    $region38: #{tpu_custom_call.1} parent=1 // pred_check
      _
    $region39: #{tpu_custom_call.1} parent=1 // pred_check_branch
      %1574 = sbr.rel (0) target = $region41
    $region40: #{tpu_custom_call.1} parent=1 // pred_region
      %s1576 = ssub.s32 1024, 1024
      %1577 = vsyncadd [#allocation5], %s1576
      %s1578 = sshll.u32 [#allocation10], 4
      %s1579 = int_to_ptr.vmem [resolvable:$true] %s1578
      %1584 = dma.vmem_to_hbm [thread:$0]  %s1579, 1024, %s6, [#allocation5], 256, 256, 16
    $region41: #{tpu_custom_call.1} parent=1 // pred_fallthru
      _
    // Predicated region
    $region42: #{tpu_custom_call.1} parent=1 // pred_check
      _
    $region43: #{tpu_custom_call.1} parent=1 // pred_check_branch
      %1586 = sbr.rel (0) target = $region45
    $region44: #{tpu_custom_call.1} parent=1 // pred_region
      %1587 = dma.done [#allocation5], 1024
    $region45: #{tpu_custom_call.1} parent=1 // pred_fallthru
      _
    %1588 = vsyncpa [#allocation4], 1
    %1589 = vsyncpa [#allocation8], 1
    %1590 = vsyncpa [#allocation5], 1
    %1591 = vsyncpa [#allocation6], 1

</llo_original>
